<compile_context>
chip_gen: v5e
topology: v5e:2x2
jax: 0.10.0
libtpu: 0.0.40
codegen_flags: <defaults>
</compile_context>

<pallas_src>
import numpy as np
import jax
import jax.numpy as jnp
from jax import lax
from jax.experimental import pallas as pl
from jax.experimental.pallas import tpu as pltpu


def fused_lstm_kernel(gates_in_ref, whh_ref, out_ref):
    """Recurrent part of both LSTMs fused into one matmul per timestep.

    gates_in_ref : (T, Bp, 4*G) precomputed x@Wih + b, gate-block layout
                   [i_s|i_r | f_s|f_r | g_s|g_r | o_s|o_r], each block G lanes.
    whh_ref      : (G, 4*G) fused block-diagonal recurrent weight.
    out_ref      : (T, Bp, G) hidden states [h_s_pad | h_r_pad] per timestep.
    """
    T = gates_in_ref.shape[0]
    Bp = gates_in_ref.shape[1]
    G = whh_ref.shape[0]                      # fused state width (= 2 * Hp)

    h0 = jnp.zeros((Bp, G), jnp.float32)
    c0 = jnp.zeros((Bp, G), jnp.float32)

    def step(t, carry):
        h, c = carry
        gates = gates_in_ref[t] + jnp.dot(h, whh_ref[...],
                                          preferred_element_type=jnp.float32)
        i = jax.nn.sigmoid(gates[:, 0 * G:1 * G])
        f = jax.nn.sigmoid(gates[:, 1 * G:2 * G])
        g = jnp.tanh(gates[:, 2 * G:3 * G])
        o = jax.nn.sigmoid(gates[:, 3 * G:4 * G])
        c_new = f * c + i * g
        h_new = o * jnp.tanh(c_new)
        out_ref[t] = h_new
        return h_new, c_new

    lax.fori_loop(0, T, step, (h0, c0), unroll=True)


def _expand_gate_cols(w, H, Hp):
    """Pad each of the 4 gate blocks along the last axis from H to Hp lanes."""
    pad = [(0, 0)] * (w.ndim - 1) + [(0, Hp - H)]
    parts = [jnp.pad(w[..., k * H:(k + 1) * H], pad) for k in range(4)]
    return jnp.concatenate(parts, axis=-1)


def init_params(key, num_countries, country_emb_dim, hidden_dim, bert_dim):
    """Deterministic synthetic parameters with PyTorch-like shapes."""
    D = bert_dim + country_emb_dim
    H = hidden_dim
    ks = jax.random.split(key, 11)
    s = 1.0 / np.sqrt(H)

    emb = jax.random.normal(ks[0], (num_countries + 1, country_emb_dim),
                            jnp.float32)
    emb = emb.at[num_countries].set(0.0)           # padding_idx row is zero

    def lstm_init(k1, k2, k3, k4):
        w_ih = jax.random.uniform(k1, (4 * H, D), jnp.float32, -s, s)
        w_hh = jax.random.uniform(k2, (4 * H, H), jnp.float32, -s, s)
        b_ih = jax.random.uniform(k3, (4 * H,), jnp.float32, -s, s)
        b_hh = jax.random.uniform(k4, (4 * H,), jnp.float32, -s, s)
        return w_ih, w_hh, b_ih, b_hh

    sender_lstm = lstm_init(*ks[1:5])
    receiver_lstm = lstm_init(*ks[5:9])

    sc = 1.0 / np.sqrt(2 * H)
    w_cls = jax.random.uniform(ks[9], (1, 2 * H), jnp.float32, -sc, sc)
    b_cls = jax.random.uniform(ks[10], (1,), jnp.float32, -sc, sc)
    return emb, sender_lstm, receiver_lstm, w_cls, b_cls


def dual_lstm_forward(message_embs, senders, receivers, lengths, params):
    """Pallas implementation of DualLSTMDeceptionDetector.forward.

    message_embs : (B, T, bert_dim) f32 — precomputed BERT [CLS] embeddings
    senders/receivers : (B, T) int32 country ids (padding_idx at padded steps)
    lengths : host int array (B,)
    Returns (B, max(lengths), 1) f32, matching pad_packed_sequence semantics.
    """
    (emb,
     (wih_s, whh_s, bih_s, bhh_s),
     (wih_r, whh_r, bih_r, bhh_r),
     w_cls, b_cls) = params

    B, T, _ = message_embs.shape
    H = whh_s.shape[1]
    Hp = int(np.ceil(H / 64) * 64)     # per-LSTM padded hidden (gate block = 2*Hp lanes)
    G = 2 * Hp                          # fused state width (128 for H=32)
    Bp = int(np.ceil(B / 8) * 8)        # pad batch to full f32 sublane group

    # ---- glue: embedding lookup + concat (plain JAX) ----
    sender_emb = jnp.take(emb, senders, axis=0)      # (B, T, E)
    receiver_emb = jnp.take(emb, receivers, axis=0)  # (B, T, E)
    x_s = jnp.concatenate([message_embs, sender_emb], axis=2)    # (B, T, D)
    x_r = jnp.concatenate([message_embs, receiver_emb], axis=2)  # (B, T, D)

    # ---- hoisted input projection: one big batched matmul per LSTM (XLA) ----
    gs = jnp.einsum('btd,gd->btg', x_s, wih_s) + (bih_s + bhh_s)  # (B, T, 4H)
    gr = jnp.einsum('btd,gd->btg', x_r, wih_r) + (bih_r + bhh_r)  # (B, T, 4H)

    # time-major, per-gate lane padding and sender/receiver interleave
    gs_e = _expand_gate_cols(jnp.transpose(gs, (1, 0, 2)), H, Hp)  # (T, B, 4Hp)
    gr_e = _expand_gate_cols(jnp.transpose(gr, (1, 0, 2)), H, Hp)
    gates_in = jnp.concatenate(
        [jnp.concatenate([gs_e[..., k * Hp:(k + 1) * Hp],
                          gr_e[..., k * Hp:(k + 1) * Hp]], axis=-1)
         for k in range(4)], axis=-1)                              # (T, B, 4G)
    gates_in = jnp.pad(gates_in, ((0, 0), (0, Bp - B), (0, 0)))    # (T, Bp, 4G)

    # ---- fused recurrent weight: per-gate block-diagonal, zero-padded ----
    ws = jnp.pad(_expand_gate_cols(whh_s.T, H, Hp), ((0, Hp - H), (0, 0)))  # (Hp, 4Hp)
    wr = jnp.pad(_expand_gate_cols(whh_r.T, H, Hp), ((0, Hp - H), (0, 0)))  # (Hp, 4Hp)
    zero = jnp.zeros((Hp, Hp), jnp.float32)
    whh_fused = jnp.concatenate(
        [jnp.concatenate(
            [jnp.concatenate([ws[:, k * Hp:(k + 1) * Hp], zero], axis=1),
             jnp.concatenate([zero, wr[:, k * Hp:(k + 1) * Hp]], axis=1)],
            axis=0)
         for k in range(4)], axis=1)                                # (G, 4G)

    # ---- single-invocation kernel: in-kernel loop over T, one writeback ----
    h_all = pl.pallas_call(
        fused_lstm_kernel,
        out_shape=jax.ShapeDtypeStruct((T, Bp, G), jnp.float32),
        grid=(1,),
        in_specs=[pl.BlockSpec((T, Bp, 4 * G), lambda i: (0, 0, 0)),
                  pl.BlockSpec((G, 4 * G), lambda i: (0, 0))],
        out_specs=pl.BlockSpec((T, Bp, G), lambda i: (0, 0, 0)),
        compiler_params=pltpu.CompilerParams(
            dimension_semantics=("arbitrary",)),
    )(gates_in, whh_fused)

    # ---- post-loop (XLA): un-pad, mask (pad_packed_sequence), classifier ----
    hs = jnp.transpose(h_all[:, :B, 0:H], (1, 0, 2))            # (B, T, H)
    hr = jnp.transpose(h_all[:, :B, Hp:Hp + H], (1, 0, 2))      # (B, T, H)

    lengths_np = np.asarray(lengths)
    mask = (jnp.arange(T, dtype=jnp.int32)[None, :] <
            jnp.asarray(lengths_np, jnp.int32)[:, None]).astype(jnp.float32)
    comb = jnp.concatenate([hs, hr], axis=2) * mask[:, :, None]  # (B, T, 2H)
    pred = comb @ w_cls.T + b_cls                                # (B, T, 1)
    t_max = int(lengths_np.max())   # pad_packed_sequence pads to max(lengths)
    return pred[:, :t_max, :]


def ref_forward(message_embs, senders, receivers, lengths, params):
    """Pure-JAX reference of the same forward pass."""
    (emb,
     (wih_s, whh_s, bih_s, bhh_s),
     (wih_r, whh_r, bih_r, bhh_r),
     w_cls, b_cls) = params
    B, T, _ = message_embs.shape
    H = whh_s.shape[1]
    se = jnp.take(emb, senders, axis=0)
    re = jnp.take(emb, receivers, axis=0)
    x_s = jnp.concatenate([message_embs, se], axis=2)
    x_r = jnp.concatenate([message_embs, re], axis=2)

    def run_lstm(x, wih, whh, bih, bhh):
        h = jnp.zeros((B, H), jnp.float32)
        c = jnp.zeros((B, H), jnp.float32)
        outs = []
        for t in range(T):
            gates = x[:, t, :] @ wih.T + h @ whh.T + bih + bhh
            i = jax.nn.sigmoid(gates[:, :H])
            f = jax.nn.sigmoid(gates[:, H:2 * H])
            g = jnp.tanh(gates[:, 2 * H:3 * H])
            o = jax.nn.sigmoid(gates[:, 3 * H:])
            c = f * c + i * g
            h = o * jnp.tanh(c)
            outs.append(h)
        return jnp.stack(outs, axis=1)      # (B, T, H)

    hs = run_lstm(x_s, wih_s, whh_s, bih_s, bhh_s)
    hr = run_lstm(x_r, wih_r, whh_r, bih_r, bhh_r)
    lengths_np = np.asarray(lengths)
    m = (np.arange(T)[None, :] < lengths_np[:, None]).astype(np.float32)
    m = jnp.asarray(m)[:, :, None]
    comb = jnp.concatenate([hs * m, hr * m], axis=2)
    pred = comb @ w_cls.T + b_cls
    return pred[:, :int(lengths_np.max()), :]


if __name__ == "__main__":
    key = jax.random.PRNGKey(0)
    num_countries = 7
    country_emb_dim = 16
    hidden_dim = 32
    bert_dim = 768
    B, T = 2, 6

    k_params, k_msg, k_snd, k_rcv = jax.random.split(key, 4)
    params = init_params(k_params, num_countries, country_emb_dim,
                         hidden_dim, bert_dim)

    # TODO(synk): the pretrained BERT encoder (get_message_embeddings) has no
    # Pallas equivalent here; we feed precomputed [CLS] embeddings instead.
    message_embs = jax.random.normal(k_msg, (B, T, bert_dim), jnp.float32)
    lengths = np.array([6, 4], dtype=np.int32)

    senders = jax.random.randint(k_snd, (B, T), 0, num_countries)
    receivers = jax.random.randint(k_rcv, (B, T), 0, num_countries)
    pad_mask = np.arange(T)[None, :] >= lengths[:, None]       # (B, T)
    senders = jnp.where(jnp.asarray(pad_mask), num_countries,
                        senders).astype(jnp.int32)
    receivers = jnp.where(jnp.asarray(pad_mask), num_countries,
                          receivers).astype(jnp.int32)
    # padded timesteps have zero message embeddings (as in the module)
    message_embs = message_embs * jnp.asarray(
        (~pad_mask).astype(np.float32))[:, :, None]

    out = dual_lstm_forward(message_embs, senders, receivers, lengths, params)
    out = jax.block_until_ready(out)

    ref = ref_forward(message_embs, senders, receivers, lengths, params)
    np.testing.assert_allclose(np.asarray(out), np.asarray(ref),
                               atol=5e-2, rtol=5e-2)
    print("KERNEL_OK")
</pallas_src>

<mosaic_0001>
module attributes {stable_mosaic.version = 11 : i64} {
  func.func @fused_lstm_kernel(%arg0: i32, %arg1: memref<6x8x512xf32, #tpu.memory_space<vmem>>, %arg2: memref<128x512xf32, #tpu.memory_space<vmem>>, %arg3: memref<6x8x128xf32, #tpu.memory_space<vmem>>) attributes {dimension_semantics = [#tpu.dimension_semantics<arbitrary>], iteration_bounds = array<i64: 1>, scalar_prefetch = 0 : i64, scratch_operands = 0 : i64, tpu.core_type = #tpu.core_type<tc>, window_params = [{pipeline_mode = #tpu.pipeline_mode<synchronous>, transform_indices = @transform_0, window_bounds = array<i64: 6, 8, 512>}, {pipeline_mode = #tpu.pipeline_mode<synchronous>, transform_indices = @transform_1, window_bounds = array<i64: 128, 512>}, {pipeline_mode = #tpu.pipeline_mode<synchronous>, transform_indices = @transform_2, window_bounds = array<i64: 6, 8, 128>}]} {
    %cst = arith.constant 0.000000e+00 : f32
    %0 = vector.broadcast %cst : f32 to vector<8x128xf32>
    %cst_0 = arith.constant 0.000000e+00 : f32
    %1 = vector.broadcast %cst_0 : f32 to vector<8x128xf32>
    %c0_i32 = arith.constant 0 : i32
    %2 = arith.index_cast %c0_i32 : i32 to index
    %c0 = arith.constant 0 : index
    %c0_1 = arith.constant 0 : index
    %3 = vector.load %arg1[%2, %c0, %c0_1] : memref<6x8x512xf32, #tpu.memory_space<vmem>>, vector<1x8x512xf32>
    %4 = vector.shape_cast %3 : vector<1x8x512xf32> to vector<8x512xf32>
    %c0_2 = arith.constant 0 : index
    %c0_3 = arith.constant 0 : index
    %5 = vector.load %arg2[%c0_2, %c0_3] : memref<128x512xf32, #tpu.memory_space<vmem>>, vector<128x512xf32>
    %cst_4 = arith.constant dense<0.000000e+00> : vector<8x512xf32>
    %6 = tpu.matmul %0, %5, %cst_4 {dimension_numbers = #tpu.dot_dimension_numbers<[1], [0], [0], [1], [0, 0, 1, 1], [], []>} : vector<8x128xf32>, vector<128x512xf32>, vector<8x512xf32> -> vector<8x512xf32>
    %7 = arith.addf %4, %6 : vector<8x512xf32>
    %8 = vector.extract_strided_slice %7 {offsets = [0, 0], sizes = [8, 128], strides = [1, 1]} : vector<8x512xf32> to vector<8x128xf32>
    %9 = arith.negf %8 : vector<8x128xf32>
    %10 = math.exp %9 : vector<8x128xf32>
    %cst_5 = arith.constant 1.000000e+00 : f32
    %11 = vector.broadcast %cst_5 : f32 to vector<8x128xf32>
    %12 = arith.addf %11, %10 : vector<8x128xf32>
    %13 = arith.divf %11, %12 : vector<8x128xf32>
    %14 = vector.extract_strided_slice %7 {offsets = [0, 128], sizes = [8, 128], strides = [1, 1]} : vector<8x512xf32> to vector<8x128xf32>
    %15 = arith.negf %14 : vector<8x128xf32>
    %16 = math.exp %15 : vector<8x128xf32>
    %cst_6 = arith.constant 1.000000e+00 : f32
    %17 = vector.broadcast %cst_6 : f32 to vector<8x128xf32>
    %18 = arith.addf %17, %16 : vector<8x128xf32>
    %19 = arith.divf %17, %18 : vector<8x128xf32>
    %20 = vector.extract_strided_slice %7 {offsets = [0, 256], sizes = [8, 128], strides = [1, 1]} : vector<8x512xf32> to vector<8x128xf32>
    %21 = math.tanh %20 : vector<8x128xf32>
    %22 = vector.extract_strided_slice %7 {offsets = [0, 384], sizes = [8, 128], strides = [1, 1]} : vector<8x512xf32> to vector<8x128xf32>
    %23 = arith.negf %22 : vector<8x128xf32>
    %24 = math.exp %23 : vector<8x128xf32>
    %cst_7 = arith.constant 1.000000e+00 : f32
    %25 = vector.broadcast %cst_7 : f32 to vector<8x128xf32>
    %26 = arith.addf %25, %24 : vector<8x128xf32>
    %27 = arith.divf %25, %26 : vector<8x128xf32>
    %28 = arith.mulf %19, %1 : vector<8x128xf32>
    %29 = arith.mulf %13, %21 : vector<8x128xf32>
    %30 = arith.addf %28, %29 : vector<8x128xf32>
    %31 = math.tanh %30 : vector<8x128xf32>
    %32 = arith.mulf %27, %31 : vector<8x128xf32>
    %33 = arith.index_cast %c0_i32 : i32 to index
    %c0_8 = arith.constant 0 : index
    %c0_9 = arith.constant 0 : index
    %34 = vector.load %arg3[%33, %c0_8, %c0_9] : memref<6x8x128xf32, #tpu.memory_space<vmem>>, vector<1x8x128xf32>
    %35 = vector.shape_cast %34 : vector<1x8x128xf32> to vector<8x128xf32>
    %36 = vector.shape_cast %32 : vector<8x128xf32> to vector<1x8x128xf32>
    tpu.vector_store %arg3[%33, %c0_8, %c0_9], %36 {strides = array<i32>} : memref<6x8x128xf32, #tpu.memory_space<vmem>>, vector<1x8x128xf32>,
    %c1_i32 = arith.constant 1 : i32
    %37 = arith.index_cast %c1_i32 : i32 to index
    %c0_10 = arith.constant 0 : index
    %c0_11 = arith.constant 0 : index
    %38 = vector.load %arg1[%37, %c0_10, %c0_11] : memref<6x8x512xf32, #tpu.memory_space<vmem>>, vector<1x8x512xf32>
    %39 = vector.shape_cast %38 : vector<1x8x512xf32> to vector<8x512xf32>
    %c0_12 = arith.constant 0 : index
    %c0_13 = arith.constant 0 : index
    %40 = vector.load %arg2[%c0_12, %c0_13] : memref<128x512xf32, #tpu.memory_space<vmem>>, vector<128x512xf32>
    %cst_14 = arith.constant dense<0.000000e+00> : vector<8x512xf32>
    %41 = tpu.matmul %32, %40, %cst_14 {dimension_numbers = #tpu.dot_dimension_numbers<[1], [0], [0], [1], [0, 0, 1, 1], [], []>} : vector<8x128xf32>, vector<128x512xf32>, vector<8x512xf32> -> vector<8x512xf32>
    %42 = arith.addf %39, %41 : vector<8x512xf32>
    %43 = vector.extract_strided_slice %42 {offsets = [0, 0], sizes = [8, 128], strides = [1, 1]} : vector<8x512xf32> to vector<8x128xf32>
    %44 = arith.negf %43 : vector<8x128xf32>
    %45 = math.exp %44 : vector<8x128xf32>
    %cst_15 = arith.constant 1.000000e+00 : f32
    %46 = vector.broadcast %cst_15 : f32 to vector<8x128xf32>
    %47 = arith.addf %46, %45 : vector<8x128xf32>
    %48 = arith.divf %46, %47 : vector<8x128xf32>
    %49 = vector.extract_strided_slice %42 {offsets = [0, 128], sizes = [8, 128], strides = [1, 1]} : vector<8x512xf32> to vector<8x128xf32>
    %50 = arith.negf %49 : vector<8x128xf32>
    %51 = math.exp %50 : vector<8x128xf32>
    %cst_16 = arith.constant 1.000000e+00 : f32
    %52 = vector.broadcast %cst_16 : f32 to vector<8x128xf32>
    %53 = arith.addf %52, %51 : vector<8x128xf32>
    %54 = arith.divf %52, %53 : vector<8x128xf32>
    %55 = vector.extract_strided_slice %42 {offsets = [0, 256], sizes = [8, 128], strides = [1, 1]} : vector<8x512xf32> to vector<8x128xf32>
    %56 = math.tanh %55 : vector<8x128xf32>
    %57 = vector.extract_strided_slice %42 {offsets = [0, 384], sizes = [8, 128], strides = [1, 1]} : vector<8x512xf32> to vector<8x128xf32>
    %58 = arith.negf %57 : vector<8x128xf32>
    %59 = math.exp %58 : vector<8x128xf32>
    %cst_17 = arith.constant 1.000000e+00 : f32
    %60 = vector.broadcast %cst_17 : f32 to vector<8x128xf32>
    %61 = arith.addf %60, %59 : vector<8x128xf32>
    %62 = arith.divf %60, %61 : vector<8x128xf32>
    %63 = arith.mulf %54, %30 : vector<8x128xf32>
    %64 = arith.mulf %48, %56 : vector<8x128xf32>
    %65 = arith.addf %63, %64 : vector<8x128xf32>
    %66 = math.tanh %65 : vector<8x128xf32>
    %67 = arith.mulf %62, %66 : vector<8x128xf32>
    %68 = arith.index_cast %c1_i32 : i32 to index
    %c0_18 = arith.constant 0 : index
    %c0_19 = arith.constant 0 : index
    %69 = vector.load %arg3[%68, %c0_18, %c0_19] : memref<6x8x128xf32, #tpu.memory_space<vmem>>, vector<1x8x128xf32>
    %70 = vector.shape_cast %69 : vector<1x8x128xf32> to vector<8x128xf32>
    %71 = vector.shape_cast %67 : vector<8x128xf32> to vector<1x8x128xf32>
    tpu.vector_store %arg3[%68, %c0_18, %c0_19], %71 {strides = array<i32>} : memref<6x8x128xf32, #tpu.memory_space<vmem>>, vector<1x8x128xf32>,
    %c2_i32 = arith.constant 2 : i32
    %72 = arith.index_cast %c2_i32 : i32 to index
    %c0_20 = arith.constant 0 : index
    %c0_21 = arith.constant 0 : index
    %73 = vector.load %arg1[%72, %c0_20, %c0_21] : memref<6x8x512xf32, #tpu.memory_space<vmem>>, vector<1x8x512xf32>
    %74 = vector.shape_cast %73 : vector<1x8x512xf32> to vector<8x512xf32>
    %c0_22 = arith.constant 0 : index
    %c0_23 = arith.constant 0 : index
    %75 = vector.load %arg2[%c0_22, %c0_23] : memref<128x512xf32, #tpu.memory_space<vmem>>, vector<128x512xf32>
    %cst_24 = arith.constant dense<0.000000e+00> : vector<8x512xf32>
    %76 = tpu.matmul %67, %75, %cst_24 {dimension_numbers = #tpu.dot_dimension_numbers<[1], [0], [0], [1], [0, 0, 1, 1], [], []>} : vector<8x128xf32>, vector<128x512xf32>, vector<8x512xf32> -> vector<8x512xf32>
    %77 = arith.addf %74, %76 : vector<8x512xf32>
    %78 = vector.extract_strided_slice %77 {offsets = [0, 0], sizes = [8, 128], strides = [1, 1]} : vector<8x512xf32> to vector<8x128xf32>
    %79 = arith.negf %78 : vector<8x128xf32>
    %80 = math.exp %79 : vector<8x128xf32>
    %cst_25 = arith.constant 1.000000e+00 : f32
    %81 = vector.broadcast %cst_25 : f32 to vector<8x128xf32>
    %82 = arith.addf %81, %80 : vector<8x128xf32>
    %83 = arith.divf %81, %82 : vector<8x128xf32>
    %84 = vector.extract_strided_slice %77 {offsets = [0, 128], sizes = [8, 128], strides = [1, 1]} : vector<8x512xf32> to vector<8x128xf32>
    %85 = arith.negf %84 : vector<8x128xf32>
    %86 = math.exp %85 : vector<8x128xf32>
    %cst_26 = arith.constant 1.000000e+00 : f32
    %87 = vector.broadcast %cst_26 : f32 to vector<8x128xf32>
    %88 = arith.addf %87, %86 : vector<8x128xf32>
    %89 = arith.divf %87, %88 : vector<8x128xf32>
    %90 = vector.extract_strided_slice %77 {offsets = [0, 256], sizes = [8, 128], strides = [1, 1]} : vector<8x512xf32> to vector<8x128xf32>
    %91 = math.tanh %90 : vector<8x128xf32>
    %92 = vector.extract_strided_slice %77 {offsets = [0, 384], sizes = [8, 128], strides = [1, 1]} : vector<8x512xf32> to vector<8x128xf32>
    %93 = arith.negf %92 : vector<8x128xf32>
    %94 = math.exp %93 : vector<8x128xf32>
    %cst_27 = arith.constant 1.000000e+00 : f32
    %95 = vector.broadcast %cst_27 : f32 to vector<8x128xf32>
    %96 = arith.addf %95, %94 : vector<8x128xf32>
    %97 = arith.divf %95, %96 : vector<8x128xf32>
    %98 = arith.mulf %89, %65 : vector<8x128xf32>
    %99 = arith.mulf %83, %91 : vector<8x128xf32>
    %100 = arith.addf %98, %99 : vector<8x128xf32>
    %101 = math.tanh %100 : vector<8x128xf32>
    %102 = arith.mulf %97, %101 : vector<8x128xf32>
    %103 = arith.index_cast %c2_i32 : i32 to index
    %c0_28 = arith.constant 0 : index
    %c0_29 = arith.constant 0 : index
    %104 = vector.load %arg3[%103, %c0_28, %c0_29] : memref<6x8x128xf32, #tpu.memory_space<vmem>>, vector<1x8x128xf32>
    %105 = vector.shape_cast %104 : vector<1x8x128xf32> to vector<8x128xf32>
    %106 = vector.shape_cast %102 : vector<8x128xf32> to vector<1x8x128xf32>
    tpu.vector_store %arg3[%103, %c0_28, %c0_29], %106 {strides = array<i32>} : memref<6x8x128xf32, #tpu.memory_space<vmem>>, vector<1x8x128xf32>,
    %c3_i32 = arith.constant 3 : i32
    %107 = arith.index_cast %c3_i32 : i32 to index
    %c0_30 = arith.constant 0 : index
    %c0_31 = arith.constant 0 : index
    %108 = vector.load %arg1[%107, %c0_30, %c0_31] : memref<6x8x512xf32, #tpu.memory_space<vmem>>, vector<1x8x512xf32>
    %109 = vector.shape_cast %108 : vector<1x8x512xf32> to vector<8x512xf32>
    %c0_32 = arith.constant 0 : index
    %c0_33 = arith.constant 0 : index
    %110 = vector.load %arg2[%c0_32, %c0_33] : memref<128x512xf32, #tpu.memory_space<vmem>>, vector<128x512xf32>
    %cst_34 = arith.constant dense<0.000000e+00> : vector<8x512xf32>
    %111 = tpu.matmul %102, %110, %cst_34 {dimension_numbers = #tpu.dot_dimension_numbers<[1], [0], [0], [1], [0, 0, 1, 1], [], []>} : vector<8x128xf32>, vector<128x512xf32>, vector<8x512xf32> -> vector<8x512xf32>
    %112 = arith.addf %109, %111 : vector<8x512xf32>
    %113 = vector.extract_strided_slice %112 {offsets = [0, 0], sizes = [8, 128], strides = [1, 1]} : vector<8x512xf32> to vector<8x128xf32>
    %114 = arith.negf %113 : vector<8x128xf32>
    %115 = math.exp %114 : vector<8x128xf32>
    %cst_35 = arith.constant 1.000000e+00 : f32
    %116 = vector.broadcast %cst_35 : f32 to vector<8x128xf32>
    %117 = arith.addf %116, %115 : vector<8x128xf32>
    %118 = arith.divf %116, %117 : vector<8x128xf32>
    %119 = vector.extract_strided_slice %112 {offsets = [0, 128], sizes = [8, 128], strides = [1, 1]} : vector<8x512xf32> to vector<8x128xf32>
    %120 = arith.negf %119 : vector<8x128xf32>
    %121 = math.exp %120 : vector<8x128xf32>
    %cst_36 = arith.constant 1.000000e+00 : f32
    %122 = vector.broadcast %cst_36 : f32 to vector<8x128xf32>
    %123 = arith.addf %122, %121 : vector<8x128xf32>
    %124 = arith.divf %122, %123 : vector<8x128xf32>
    %125 = vector.extract_strided_slice %112 {offsets = [0, 256], sizes = [8, 128], strides = [1, 1]} : vector<8x512xf32> to vector<8x128xf32>
    %126 = math.tanh %125 : vector<8x128xf32>
    %127 = vector.extract_strided_slice %112 {offsets = [0, 384], sizes = [8, 128], strides = [1, 1]} : vector<8x512xf32> to vector<8x128xf32>
    %128 = arith.negf %127 : vector<8x128xf32>
    %129 = math.exp %128 : vector<8x128xf32>
    %cst_37 = arith.constant 1.000000e+00 : f32
    %130 = vector.broadcast %cst_37 : f32 to vector<8x128xf32>
    %131 = arith.addf %130, %129 : vector<8x128xf32>
    %132 = arith.divf %130, %131 : vector<8x128xf32>
    %133 = arith.mulf %124, %100 : vector<8x128xf32>
    %134 = arith.mulf %118, %126 : vector<8x128xf32>
    %135 = arith.addf %133, %134 : vector<8x128xf32>
    %136 = math.tanh %135 : vector<8x128xf32>
    %137 = arith.mulf %132, %136 : vector<8x128xf32>
    %138 = arith.index_cast %c3_i32 : i32 to index
    %c0_38 = arith.constant 0 : index
    %c0_39 = arith.constant 0 : index
    %139 = vector.load %arg3[%138, %c0_38, %c0_39] : memref<6x8x128xf32, #tpu.memory_space<vmem>>, vector<1x8x128xf32>
    %140 = vector.shape_cast %139 : vector<1x8x128xf32> to vector<8x128xf32>
    %141 = vector.shape_cast %137 : vector<8x128xf32> to vector<1x8x128xf32>
    tpu.vector_store %arg3[%138, %c0_38, %c0_39], %141 {strides = array<i32>} : memref<6x8x128xf32, #tpu.memory_space<vmem>>, vector<1x8x128xf32>,
    %c4_i32 = arith.constant 4 : i32
    %142 = arith.index_cast %c4_i32 : i32 to index
    %c0_40 = arith.constant 0 : index
    %c0_41 = arith.constant 0 : index
    %143 = vector.load %arg1[%142, %c0_40, %c0_41] : memref<6x8x512xf32, #tpu.memory_space<vmem>>, vector<1x8x512xf32>
    %144 = vector.shape_cast %143 : vector<1x8x512xf32> to vector<8x512xf32>
    %c0_42 = arith.constant 0 : index
    %c0_43 = arith.constant 0 : index
    %145 = vector.load %arg2[%c0_42, %c0_43] : memref<128x512xf32, #tpu.memory_space<vmem>>, vector<128x512xf32>
    %cst_44 = arith.constant dense<0.000000e+00> : vector<8x512xf32>
    %146 = tpu.matmul %137, %145, %cst_44 {dimension_numbers = #tpu.dot_dimension_numbers<[1], [0], [0], [1], [0, 0, 1, 1], [], []>} : vector<8x128xf32>, vector<128x512xf32>, vector<8x512xf32> -> vector<8x512xf32>
    %147 = arith.addf %144, %146 : vector<8x512xf32>
    %148 = vector.extract_strided_slice %147 {offsets = [0, 0], sizes = [8, 128], strides = [1, 1]} : vector<8x512xf32> to vector<8x128xf32>
    %149 = arith.negf %148 : vector<8x128xf32>
    %150 = math.exp %149 : vector<8x128xf32>
    %cst_45 = arith.constant 1.000000e+00 : f32
    %151 = vector.broadcast %cst_45 : f32 to vector<8x128xf32>
    %152 = arith.addf %151, %150 : vector<8x128xf32>
    %153 = arith.divf %151, %152 : vector<8x128xf32>
    %154 = vector.extract_strided_slice %147 {offsets = [0, 128], sizes = [8, 128], strides = [1, 1]} : vector<8x512xf32> to vector<8x128xf32>
    %155 = arith.negf %154 : vector<8x128xf32>
    %156 = math.exp %155 : vector<8x128xf32>
    %cst_46 = arith.constant 1.000000e+00 : f32
    %157 = vector.broadcast %cst_46 : f32 to vector<8x128xf32>
    %158 = arith.addf %157, %156 : vector<8x128xf32>
    %159 = arith.divf %157, %158 : vector<8x128xf32>
    %160 = vector.extract_strided_slice %147 {offsets = [0, 256], sizes = [8, 128], strides = [1, 1]} : vector<8x512xf32> to vector<8x128xf32>
    %161 = math.tanh %160 : vector<8x128xf32>
    %162 = vector.extract_strided_slice %147 {offsets = [0, 384], sizes = [8, 128], strides = [1, 1]} : vector<8x512xf32> to vector<8x128xf32>
    %163 = arith.negf %162 : vector<8x128xf32>
    %164 = math.exp %163 : vector<8x128xf32>
    %cst_47 = arith.constant 1.000000e+00 : f32
    %165 = vector.broadcast %cst_47 : f32 to vector<8x128xf32>
    %166 = arith.addf %165, %164 : vector<8x128xf32>
    %167 = arith.divf %165, %166 : vector<8x128xf32>
    %168 = arith.mulf %159, %135 : vector<8x128xf32>
    %169 = arith.mulf %153, %161 : vector<8x128xf32>
    %170 = arith.addf %168, %169 : vector<8x128xf32>
    %171 = math.tanh %170 : vector<8x128xf32>
    %172 = arith.mulf %167, %171 : vector<8x128xf32>
    %173 = arith.index_cast %c4_i32 : i32 to index
    %c0_48 = arith.constant 0 : index
    %c0_49 = arith.constant 0 : index
    %174 = vector.load %arg3[%173, %c0_48, %c0_49] : memref<6x8x128xf32, #tpu.memory_space<vmem>>, vector<1x8x128xf32>
    %175 = vector.shape_cast %174 : vector<1x8x128xf32> to vector<8x128xf32>
    %176 = vector.shape_cast %172 : vector<8x128xf32> to vector<1x8x128xf32>
    tpu.vector_store %arg3[%173, %c0_48, %c0_49], %176 {strides = array<i32>} : memref<6x8x128xf32, #tpu.memory_space<vmem>>, vector<1x8x128xf32>,
    %c5_i32 = arith.constant 5 : i32
    %177 = arith.index_cast %c5_i32 : i32 to index
    %c0_50 = arith.constant 0 : index
    %c0_51 = arith.constant 0 : index
    %178 = vector.load %arg1[%177, %c0_50, %c0_51] : memref<6x8x512xf32, #tpu.memory_space<vmem>>, vector<1x8x512xf32>
    %179 = vector.shape_cast %178 : vector<1x8x512xf32> to vector<8x512xf32>
    %c0_52 = arith.constant 0 : index
    %c0_53 = arith.constant 0 : index
    %180 = vector.load %arg2[%c0_52, %c0_53] : memref<128x512xf32, #tpu.memory_space<vmem>>, vector<128x512xf32>
    %cst_54 = arith.constant dense<0.000000e+00> : vector<8x512xf32>
    %181 = tpu.matmul %172, %180, %cst_54 {dimension_numbers = #tpu.dot_dimension_numbers<[1], [0], [0], [1], [0, 0, 1, 1], [], []>} : vector<8x128xf32>, vector<128x512xf32>, vector<8x512xf32> -> vector<8x512xf32>
    %182 = arith.addf %179, %181 : vector<8x512xf32>
    %183 = vector.extract_strided_slice %182 {offsets = [0, 0], sizes = [8, 128], strides = [1, 1]} : vector<8x512xf32> to vector<8x128xf32>
    %184 = arith.negf %183 : vector<8x128xf32>
    %185 = math.exp %184 : vector<8x128xf32>
    %cst_55 = arith.constant 1.000000e+00 : f32
    %186 = vector.broadcast %cst_55 : f32 to vector<8x128xf32>
    %187 = arith.addf %186, %185 : vector<8x128xf32>
    %188 = arith.divf %186, %187 : vector<8x128xf32>
    %189 = vector.extract_strided_slice %182 {offsets = [0, 128], sizes = [8, 128], strides = [1, 1]} : vector<8x512xf32> to vector<8x128xf32>
    %190 = arith.negf %189 : vector<8x128xf32>
    %191 = math.exp %190 : vector<8x128xf32>
    %cst_56 = arith.constant 1.000000e+00 : f32
    %192 = vector.broadcast %cst_56 : f32 to vector<8x128xf32>
    %193 = arith.addf %192, %191 : vector<8x128xf32>
    %194 = arith.divf %192, %193 : vector<8x128xf32>
    %195 = vector.extract_strided_slice %182 {offsets = [0, 256], sizes = [8, 128], strides = [1, 1]} : vector<8x512xf32> to vector<8x128xf32>
    %196 = math.tanh %195 : vector<8x128xf32>
    %197 = vector.extract_strided_slice %182 {offsets = [0, 384], sizes = [8, 128], strides = [1, 1]} : vector<8x512xf32> to vector<8x128xf32>
    %198 = arith.negf %197 : vector<8x128xf32>
    %199 = math.exp %198 : vector<8x128xf32>
    %cst_57 = arith.constant 1.000000e+00 : f32
    %200 = vector.broadcast %cst_57 : f32 to vector<8x128xf32>
    %201 = arith.addf %200, %199 : vector<8x128xf32>
    %202 = arith.divf %200, %201 : vector<8x128xf32>
    %203 = arith.mulf %194, %170 : vector<8x128xf32>
    %204 = arith.mulf %188, %196 : vector<8x128xf32>
    %205 = arith.addf %203, %204 : vector<8x128xf32>
    %206 = math.tanh %205 : vector<8x128xf32>
    %207 = arith.mulf %202, %206 : vector<8x128xf32>
    %208 = arith.index_cast %c5_i32 : i32 to index
    %c0_58 = arith.constant 0 : index
    %c0_59 = arith.constant 0 : index
    %209 = vector.load %arg3[%208, %c0_58, %c0_59] : memref<6x8x128xf32, #tpu.memory_space<vmem>>, vector<1x8x128xf32>
    %210 = vector.shape_cast %209 : vector<1x8x128xf32> to vector<8x128xf32>
    %211 = vector.shape_cast %207 : vector<8x128xf32> to vector<1x8x128xf32>
    tpu.vector_store %arg3[%208, %c0_58, %c0_59], %211 {strides = array<i32>} : memref<6x8x128xf32, #tpu.memory_space<vmem>>, vector<1x8x128xf32>,
    %c6_i32 = arith.constant 6 : i32
    return
  }
  func.func @transform_0(%arg0: i32) -> (i32, i32, i32) {
    %c0_i32 = arith.constant 0 : i32
    %c0_i32_0 = arith.constant 0 : i32
    %c0_i32_1 = arith.constant 0 : i32
    %c0_i32_2 = arith.constant 0 : i32
    return %c0_i32, %c0_i32_0, %c0_i32_1 : i32, i32, i32
  }
  func.func @transform_1(%arg0: i32) -> (i32, i32) {
    %c0_i32 = arith.constant 0 : i32
    %c0_i32_0 = arith.constant 0 : i32
    %c0_i32_1 = arith.constant 0 : i32
    return %c0_i32, %c0_i32_0 : i32, i32
  }
  func.func @transform_2(%arg0: i32) -> (i32, i32, i32) {
    %c0_i32 = arith.constant 0 : i32
    %c0_i32_0 = arith.constant 0 : i32
    %c0_i32_1 = arith.constant 0 : i32
    %c0_i32_2 = arith.constant 0 : i32
    return %c0_i32, %c0_i32_0, %c0_i32_1 : i32, i32, i32
  }
}

</mosaic_0001>

<llo_original>
// kernel: tpu_custom_call.1
$region0: #{tpu_custom_call.1}
  #allocation0 [shape = 'u32[]', space=smem, size = 0x4, offset = 0x4, fixed_abs, tag = 'smem constant byte address 0x4 - core index']
  #allocation1 [shape = 'u32[72,128]{1,0:T(1,128)}', space=vmem, size = 0x9000, scoped, tag = 'internal scratch']
  %s0 = inlined_call_operand.hbm [shape: f32[6,8,512], index: 0, kind: input, shape index: {}]
  %s1 = inlined_call_operand.hbm [shape: f32[128,512], index: 1, kind: input, shape index: {}]
  %s2 = inlined_call_operand.hbm [shape: f32[6,8,128], index: 2, kind: output, shape index: {}]
  %s3 = sld [smem:[#allocation0]]
  $region26: #{tpu_custom_call.1} parent=0
    _
  %s5 = ssub.s32 1, %s3
  %s6 = scalar_select 0, %s5, %s3
  $region1: #{tpu_custom_call.1} parent=0
    #allocation2 [shape = 'u8[98304]{0}', space=vmem, size = 0x18000, scoped, tag = 'input window, operand 0, single buffered']
    #allocation3 [shape = 's32[1]{0}', space=sflag, size = 0x4, scoped, tag = 'scoped memory for tpu_custom_call.1']
    #allocation4 [shape = 's32[1]{0}', space=sflag, size = 0x4, scoped, tag = 'scoped memory for tpu_custom_call.1']
    #allocation5 [shape = 'u8[262144]{0}', space=vmem, size = 0x40000, scoped, tag = 'input window, operand 1, single buffered']
    #allocation6 [shape = 's32[1]{0}', space=sflag, size = 0x4, scoped, tag = 'scoped memory for tpu_custom_call.1']
    #allocation7 [shape = 'u8[24576]{0}', space=vmem, size = 0x6000, scoped, tag = 'output window, operand 0, single buffered']
    %7 = vsyncpa [#allocation3], 0
    %8 = vsyncpa [#allocation6], 0
    %9 = vsyncpa [#allocation4], 0
    // Predicated region
    $region2: #{tpu_custom_call.1} parent=1 // pred_check
      _
    $region3: #{tpu_custom_call.1} parent=1 // pred_check_branch
      %11 = sbr.rel (0) target = $region5
    $region4: #{tpu_custom_call.1} parent=1 // pred_region
      %13 = vsyncadd [#allocation3], 0
      %s14 = sshll.u32 %s0, 4
      %s15 = int_to_ptr.hbm [resolvable:$true] %s14
      %s16 = sshll.u32 [#allocation2], 4
      %s17 = int_to_ptr.vmem [resolvable:$true] %s16
      %22 = dma.hbm_to_vmem [thread:$0]  %s15, 3072, %s17, [#allocation3], 512, 512, 32
    $region5: #{tpu_custom_call.1} parent=1 // pred_fallthru
      _
    // Predicated region
    $region6: #{tpu_custom_call.1} parent=1 // pred_check
      _
    $region7: #{tpu_custom_call.1} parent=1 // pred_check_branch
      %24 = sbr.rel (0) target = $region9
    $region8: #{tpu_custom_call.1} parent=1 // pred_region
      %26 = vsyncadd [#allocation6], 0
      %s27 = sshll.u32 %s1, 4
      %s28 = int_to_ptr.hbm [resolvable:$true] %s27
      %s29 = sshll.u32 [#allocation5], 4
      %s30 = int_to_ptr.vmem [resolvable:$true] %s29
      %35 = dma.hbm_to_vmem [thread:$0]  %s28, 8192, %s30, [#allocation6], 512, 512, 32
    $region9: #{tpu_custom_call.1} parent=1 // pred_fallthru
      _
    // Predicated region
    $region10: #{tpu_custom_call.1} parent=1 // pred_check
      _
    $region11: #{tpu_custom_call.1} parent=1 // pred_check_branch
      %37 = sbr.rel (0) target = $region13
    $region12: #{tpu_custom_call.1} parent=1 // pred_region
      %39 = dma.done [#allocation3], 3072
    $region13: #{tpu_custom_call.1} parent=1 // pred_fallthru
      _
    // Predicated region
    $region14: #{tpu_custom_call.1} parent=1 // pred_check
      _
    $region15: #{tpu_custom_call.1} parent=1 // pred_check_branch
      %41 = sbr.rel (0) target = $region17
    $region16: #{tpu_custom_call.1} parent=1 // pred_region
      %43 = dma.done [#allocation6], 8192
    $region17: #{tpu_custom_call.1} parent=1 // pred_fallthru
      _
    %v44 = vld [vmem:[#allocation2] sm:$0xff]
    %v45 = vld [vmem:[#allocation2 + $0x8] sm:$0xff]
    %v46 = vld [vmem:[#allocation2 + $0x10] sm:$0xff]
    %v47 = vld [vmem:[#allocation2 + $0x18] sm:$0xff]
    %v48 = vld [vmem:[#allocation5] sm:$0xff]
    %v49 = vld [vmem:[#allocation5 + $0x8] sm:$0xff]
    %v50 = vld [vmem:[#allocation5 + $0x10] sm:$0xff]
    %v51 = vld [vmem:[#allocation5 + $0x18] sm:$0xff]
    %v52 = vld [vmem:[#allocation5 + $0x20] sm:$0xff]
    %v53 = vld [vmem:[#allocation5 + $0x28] sm:$0xff]
    %v54 = vld [vmem:[#allocation5 + $0x30] sm:$0xff]
    %v55 = vld [vmem:[#allocation5 + $0x38] sm:$0xff]
    %v56 = vld [vmem:[#allocation5 + $0x40] sm:$0xff]
    %v57 = vld [vmem:[#allocation5 + $0x48] sm:$0xff]
    %v58 = vld [vmem:[#allocation5 + $0x50] sm:$0xff]
    %v59 = vld [vmem:[#allocation5 + $0x58] sm:$0xff]
    %v60 = vld [vmem:[#allocation5 + $0x60] sm:$0xff]
    %v61 = vld [vmem:[#allocation5 + $0x68] sm:$0xff]
    %v62 = vld [vmem:[#allocation5 + $0x70] sm:$0xff]
    %v63 = vld [vmem:[#allocation5 + $0x78] sm:$0xff]
    %v64 = vld [vmem:[#allocation5 + $0x80] sm:$0xff]
    %v65 = vld [vmem:[#allocation5 + $0x88] sm:$0xff]
    %v66 = vld [vmem:[#allocation5 + $0x90] sm:$0xff]
    %v67 = vld [vmem:[#allocation5 + $0x98] sm:$0xff]
    %v68 = vld [vmem:[#allocation5 + $0xa0] sm:$0xff]
    %v69 = vld [vmem:[#allocation5 + $0xa8] sm:$0xff]
    %v70 = vld [vmem:[#allocation5 + $0xb0] sm:$0xff]
    %v71 = vld [vmem:[#allocation5 + $0xb8] sm:$0xff]
    %v72 = vld [vmem:[#allocation5 + $0xc0] sm:$0xff]
    %v73 = vld [vmem:[#allocation5 + $0xc8] sm:$0xff]
    %v74 = vld [vmem:[#allocation5 + $0xd0] sm:$0xff]
    %v75 = vld [vmem:[#allocation5 + $0xd8] sm:$0xff]
    %v76 = vld [vmem:[#allocation5 + $0xe0] sm:$0xff]
    %v77 = vld [vmem:[#allocation5 + $0xe8] sm:$0xff]
    %v78 = vld [vmem:[#allocation5 + $0xf0] sm:$0xff]
    %v79 = vld [vmem:[#allocation5 + $0xf8] sm:$0xff]
    %v80 = vld [vmem:[#allocation5 + $0x100] sm:$0xff]
    %v81 = vld [vmem:[#allocation5 + $0x108] sm:$0xff]
    %v82 = vld [vmem:[#allocation5 + $0x110] sm:$0xff]
    %v83 = vld [vmem:[#allocation5 + $0x118] sm:$0xff]
    %v84 = vld [vmem:[#allocation5 + $0x120] sm:$0xff]
    %v85 = vld [vmem:[#allocation5 + $0x128] sm:$0xff]
    %v86 = vld [vmem:[#allocation5 + $0x130] sm:$0xff]
    %v87 = vld [vmem:[#allocation5 + $0x138] sm:$0xff]
    %v88 = vld [vmem:[#allocation5 + $0x140] sm:$0xff]
    %v89 = vld [vmem:[#allocation5 + $0x148] sm:$0xff]
    %v90 = vld [vmem:[#allocation5 + $0x150] sm:$0xff]
    %v91 = vld [vmem:[#allocation5 + $0x158] sm:$0xff]
    %v92 = vld [vmem:[#allocation5 + $0x160] sm:$0xff]
    %v93 = vld [vmem:[#allocation5 + $0x168] sm:$0xff]
    %v94 = vld [vmem:[#allocation5 + $0x170] sm:$0xff]
    %v95 = vld [vmem:[#allocation5 + $0x178] sm:$0xff]
    %v96 = vld [vmem:[#allocation5 + $0x180] sm:$0xff]
    %v97 = vld [vmem:[#allocation5 + $0x188] sm:$0xff]
    %v98 = vld [vmem:[#allocation5 + $0x190] sm:$0xff]
    %v99 = vld [vmem:[#allocation5 + $0x198] sm:$0xff]
    %v100 = vld [vmem:[#allocation5 + $0x1a0] sm:$0xff]
    %v101 = vld [vmem:[#allocation5 + $0x1a8] sm:$0xff]
    %v102 = vld [vmem:[#allocation5 + $0x1b0] sm:$0xff]
    %v103 = vld [vmem:[#allocation5 + $0x1b8] sm:$0xff]
    %v104 = vld [vmem:[#allocation5 + $0x1c0] sm:$0xff]
    %v105 = vld [vmem:[#allocation5 + $0x1c8] sm:$0xff]
    %v106 = vld [vmem:[#allocation5 + $0x1d0] sm:$0xff]
    %v107 = vld [vmem:[#allocation5 + $0x1d8] sm:$0xff]
    %v108 = vld [vmem:[#allocation5 + $0x1e0] sm:$0xff]
    %v109 = vld [vmem:[#allocation5 + $0x1e8] sm:$0xff]
    %v110 = vld [vmem:[#allocation5 + $0x1f0] sm:$0xff]
    %v111 = vld [vmem:[#allocation5 + $0x1f8] sm:$0xff]
    %112 = vmatpush.msra.mxu0 %v108
    %113 = vmatpush.msra.mxu0 %v104
    %114 = vmatpush.msra.mxu0 %v100
    %115 = vmatpush.msra.mxu0 %v96
    %116 = vmatpush.msra.mxu0 %v92
    %117 = vmatpush.msra.mxu0 %v88
    %118 = vmatpush.msra.mxu0 %v84
    %119 = vmatpush.msra.mxu0 %v80
    %120 = vmatpush.msra.mxu0 %v76
    %121 = vmatpush.msra.mxu0 %v72
    %122 = vmatpush.msra.mxu0 %v68
    %123 = vmatpush.msra.mxu0 %v64
    %124 = vmatpush.msra.mxu0 %v60
    %125 = vmatpush.msra.mxu0 %v56
    %126 = vmatpush.msra.mxu0 %v52
    %127 = vmatpush.msra.mxu0 %v48
    %128 = vmatmul.f32.gmra.mxu0 0.0
    %v129 = vpop.f32.mrf.mxu0
    %v130 = vadd.f32 0.0, %v129
    %131 = vdwg.mxu0
    %132 = vmatpush.msra.mxu0 %v109
    %133 = vmatpush.msra.mxu0 %v105
    %134 = vmatpush.msra.mxu0 %v101
    %135 = vmatpush.msra.mxu0 %v97
    %136 = vmatpush.msra.mxu0 %v93
    %137 = vmatpush.msra.mxu0 %v89
    %138 = vmatpush.msra.mxu0 %v85
    %139 = vmatpush.msra.mxu0 %v81
    %140 = vmatpush.msra.mxu0 %v77
    %141 = vmatpush.msra.mxu0 %v73
    %142 = vmatpush.msra.mxu0 %v69
    %143 = vmatpush.msra.mxu0 %v65
    %144 = vmatpush.msra.mxu0 %v61
    %145 = vmatpush.msra.mxu0 %v57
    %146 = vmatpush.msra.mxu0 %v53
    %147 = vmatpush.msra.mxu0 %v49
    %148 = vmatmul.f32.gmra.mxu0 0.0
    %v149 = vpop.f32.mrf.mxu0
    %v150 = vadd.f32 0.0, %v149
    %151 = vdwg.mxu0
    %152 = vmatpush.msra.mxu0 %v110
    %153 = vmatpush.msra.mxu0 %v106
    %154 = vmatpush.msra.mxu0 %v102
    %155 = vmatpush.msra.mxu0 %v98
    %156 = vmatpush.msra.mxu0 %v94
    %157 = vmatpush.msra.mxu0 %v90
    %158 = vmatpush.msra.mxu0 %v86
    %159 = vmatpush.msra.mxu0 %v82
    %160 = vmatpush.msra.mxu0 %v78
    %161 = vmatpush.msra.mxu0 %v74
    %162 = vmatpush.msra.mxu0 %v70
    %163 = vmatpush.msra.mxu0 %v66
    %164 = vmatpush.msra.mxu0 %v62
    %165 = vmatpush.msra.mxu0 %v58
    %166 = vmatpush.msra.mxu0 %v54
    %167 = vmatpush.msra.mxu0 %v50
    %168 = vmatmul.f32.gmra.mxu0 0.0
    %v169 = vpop.f32.mrf.mxu0
    %v170 = vadd.f32 0.0, %v169
    %171 = vdwg.mxu0
    %172 = vmatpush.msra.mxu0 %v111
    %173 = vmatpush.msra.mxu0 %v107
    %174 = vmatpush.msra.mxu0 %v103
    %175 = vmatpush.msra.mxu0 %v99
    %176 = vmatpush.msra.mxu0 %v95
    %177 = vmatpush.msra.mxu0 %v91
    %178 = vmatpush.msra.mxu0 %v87
    %179 = vmatpush.msra.mxu0 %v83
    %180 = vmatpush.msra.mxu0 %v79
    %181 = vmatpush.msra.mxu0 %v75
    %182 = vmatpush.msra.mxu0 %v71
    %183 = vmatpush.msra.mxu0 %v67
    %184 = vmatpush.msra.mxu0 %v63
    %185 = vmatpush.msra.mxu0 %v59
    %186 = vmatpush.msra.mxu0 %v55
    %187 = vmatpush.msra.mxu0 %v51
    %188 = vmatmul.f32.gmra.mxu0 0.0
    %v189 = vpop.f32.mrf.mxu0
    %v190 = vadd.f32 0.0, %v189
    %191 = vdwg.mxu0
    %v192 = vadd.f32 %v44, %v130
    %v193 = vadd.f32 %v45, %v150
    %v194 = vadd.f32 %v46, %v170
    %v195 = vadd.f32 %v47, %v190
    %v196 = vxor.u32 %v192, 2147483648
    %v197 = vmul.f32 %v196, 1.442695
    %v198 = vpow.pop %v197
    %v199 = vadd.f32 %v198, 1.0
    %v200 = vrcp.pop %v199
    %v201 = vmul.f32 %v199, %v200
    %v202 = vsub.f32 1.0, %v201
    %v203 = vmul.f32 %v200, %v202
    %v204 = vadd.f32 %v200, %v203
    %vm205 = vweird.f32 %v199
    %vm206 = vweird.f32 %v200
    %vm207 = vmor %vm205, %vm206
    %v208 = vsel %vm207, %v200, %v204
    %v209 = vand.u32 2147483647, %v199
    %vm210 = vcmp.eq.f32.partialorder %v209, 8.507059e+37
    %v211 = vand.u32 %v199, 2147483648
    %v212 = vor.u32 1.1754944e-38, %v211
    %v213 = vsel %vm210, %v212, %v208
    %v214 = vmul.f32 1.0, %v213
    %v215 = vxor.u32 %v193, 2147483648
    %v216 = vmul.f32 %v215, 1.442695
    %v217 = vpow.pop %v216
    %v218 = vadd.f32 %v217, 1.0
    %v219 = vrcp.pop %v218
    %v220 = vmul.f32 %v218, %v219
    %v221 = vsub.f32 1.0, %v220
    %v222 = vmul.f32 %v219, %v221
    %v223 = vadd.f32 %v219, %v222
    %vm224 = vweird.f32 %v218
    %vm225 = vweird.f32 %v219
    %vm226 = vmor %vm224, %vm225
    %v227 = vsel %vm226, %v219, %v223
    %v228 = vand.u32 2147483647, %v218
    %vm229 = vcmp.eq.f32.partialorder %v228, 8.507059e+37
    %v230 = vand.u32 %v218, 2147483648
    %v231 = vor.u32 1.1754944e-38, %v230
    %v232 = vsel %vm229, %v231, %v227
    %v233 = vmul.f32 1.0, %v232
    %v234 = vtanh.pop %v194
    %v235 = vxor.u32 %v195, 2147483648
    %v236 = vmul.f32 %v235, 1.442695
    %v237 = vpow.pop %v236
    %v238 = vadd.f32 %v237, 1.0
    %v239 = vrcp.pop %v238
    %v240 = vmul.f32 %v238, %v239
    %v241 = vsub.f32 1.0, %v240
    %v242 = vmul.f32 %v239, %v241
    %v243 = vadd.f32 %v239, %v242
    %vm244 = vweird.f32 %v238
    %vm245 = vweird.f32 %v239
    %vm246 = vmor %vm244, %vm245
    %v247 = vsel %vm246, %v239, %v243
    %v248 = vand.u32 2147483647, %v238
    %vm249 = vcmp.eq.f32.partialorder %v248, 8.507059e+37
    %v250 = vand.u32 %v238, 2147483648
    %v251 = vor.u32 1.1754944e-38, %v250
    %v252 = vsel %vm249, %v251, %v247
    %v253 = vmul.f32 1.0, %v252
    %v254 = vmul.f32 %v233, 0.0
    %v255 = vmul.f32 %v214, %v234
    %v256 = vadd.f32 %v254, %v255
    %v257 = vtanh.pop %v256
    %v258 = vmul.f32 %v253, %v257
    %259 = vst [vmem:[#allocation7] sm:$0xff] %v258
    %s260 = scalar_lea.vmem [#allocation2], 32
    %v261 = vld [vmem:[%s260] sm:$0xff]
    %v262 = vld [vmem:[%s260 + $0x8] sm:$0xff]
    %v263 = vld [vmem:[%s260 + $0x10] sm:$0xff]
    %v264 = vld [vmem:[%s260 + $0x18] sm:$0xff]
    %v265 = vld [vmem:[#allocation5] sm:$0xff]
    %v266 = vld [vmem:[#allocation5 + $0x8] sm:$0xff]
    %v267 = vld [vmem:[#allocation5 + $0x10] sm:$0xff]
    %v268 = vld [vmem:[#allocation5 + $0x18] sm:$0xff]
    %v269 = vld [vmem:[#allocation5 + $0x20] sm:$0xff]
    %v270 = vld [vmem:[#allocation5 + $0x28] sm:$0xff]
    %v271 = vld [vmem:[#allocation5 + $0x30] sm:$0xff]
    %v272 = vld [vmem:[#allocation5 + $0x38] sm:$0xff]
    %v273 = vld [vmem:[#allocation5 + $0x40] sm:$0xff]
    %v274 = vld [vmem:[#allocation5 + $0x48] sm:$0xff]
    %v275 = vld [vmem:[#allocation5 + $0x50] sm:$0xff]
    %v276 = vld [vmem:[#allocation5 + $0x58] sm:$0xff]
    %v277 = vld [vmem:[#allocation5 + $0x60] sm:$0xff]
    %v278 = vld [vmem:[#allocation5 + $0x68] sm:$0xff]
    %v279 = vld [vmem:[#allocation5 + $0x70] sm:$0xff]
    %v280 = vld [vmem:[#allocation5 + $0x78] sm:$0xff]
    %v281 = vld [vmem:[#allocation5 + $0x80] sm:$0xff]
    %v282 = vld [vmem:[#allocation5 + $0x88] sm:$0xff]
    %v283 = vld [vmem:[#allocation5 + $0x90] sm:$0xff]
    %v284 = vld [vmem:[#allocation5 + $0x98] sm:$0xff]
    %v285 = vld [vmem:[#allocation5 + $0xa0] sm:$0xff]
    %v286 = vld [vmem:[#allocation5 + $0xa8] sm:$0xff]
    %v287 = vld [vmem:[#allocation5 + $0xb0] sm:$0xff]
    %v288 = vld [vmem:[#allocation5 + $0xb8] sm:$0xff]
    %v289 = vld [vmem:[#allocation5 + $0xc0] sm:$0xff]
    %v290 = vld [vmem:[#allocation5 + $0xc8] sm:$0xff]
    %v291 = vld [vmem:[#allocation5 + $0xd0] sm:$0xff]
    %v292 = vld [vmem:[#allocation5 + $0xd8] sm:$0xff]
    %v293 = vld [vmem:[#allocation5 + $0xe0] sm:$0xff]
    %v294 = vld [vmem:[#allocation5 + $0xe8] sm:$0xff]
    %v295 = vld [vmem:[#allocation5 + $0xf0] sm:$0xff]
    %v296 = vld [vmem:[#allocation5 + $0xf8] sm:$0xff]
    %v297 = vld [vmem:[#allocation5 + $0x100] sm:$0xff]
    %v298 = vld [vmem:[#allocation5 + $0x108] sm:$0xff]
    %v299 = vld [vmem:[#allocation5 + $0x110] sm:$0xff]
    %v300 = vld [vmem:[#allocation5 + $0x118] sm:$0xff]
    %v301 = vld [vmem:[#allocation5 + $0x120] sm:$0xff]
    %v302 = vld [vmem:[#allocation5 + $0x128] sm:$0xff]
    %v303 = vld [vmem:[#allocation5 + $0x130] sm:$0xff]
    %v304 = vld [vmem:[#allocation5 + $0x138] sm:$0xff]
    %v305 = vld [vmem:[#allocation5 + $0x140] sm:$0xff]
    %v306 = vld [vmem:[#allocation5 + $0x148] sm:$0xff]
    %v307 = vld [vmem:[#allocation5 + $0x150] sm:$0xff]
    %v308 = vld [vmem:[#allocation5 + $0x158] sm:$0xff]
    %v309 = vld [vmem:[#allocation5 + $0x160] sm:$0xff]
    %v310 = vld [vmem:[#allocation5 + $0x168] sm:$0xff]
    %v311 = vld [vmem:[#allocation5 + $0x170] sm:$0xff]
    %v312 = vld [vmem:[#allocation5 + $0x178] sm:$0xff]
    %v313 = vld [vmem:[#allocation5 + $0x180] sm:$0xff]
    %v314 = vld [vmem:[#allocation5 + $0x188] sm:$0xff]
    %v315 = vld [vmem:[#allocation5 + $0x190] sm:$0xff]
    %v316 = vld [vmem:[#allocation5 + $0x198] sm:$0xff]
    %v317 = vld [vmem:[#allocation5 + $0x1a0] sm:$0xff]
    %v318 = vld [vmem:[#allocation5 + $0x1a8] sm:$0xff]
    %v319 = vld [vmem:[#allocation5 + $0x1b0] sm:$0xff]
    %v320 = vld [vmem:[#allocation5 + $0x1b8] sm:$0xff]
    %v321 = vld [vmem:[#allocation5 + $0x1c0] sm:$0xff]
    %v322 = vld [vmem:[#allocation5 + $0x1c8] sm:$0xff]
    %v323 = vld [vmem:[#allocation5 + $0x1d0] sm:$0xff]
    %v324 = vld [vmem:[#allocation5 + $0x1d8] sm:$0xff]
    %v325 = vld [vmem:[#allocation5 + $0x1e0] sm:$0xff]
    %v326 = vld [vmem:[#allocation5 + $0x1e8] sm:$0xff]
    %v327 = vld [vmem:[#allocation5 + $0x1f0] sm:$0xff]
    %v328 = vld [vmem:[#allocation5 + $0x1f8] sm:$0xff]
    %329 = vmatpush.msra.mxu0 %v325
    %330 = vmatpush.msra.mxu0 %v321
    %331 = vmatpush.msra.mxu0 %v317
    %332 = vmatpush.msra.mxu0 %v313
    %333 = vmatpush.msra.mxu0 %v309
    %334 = vmatpush.msra.mxu0 %v305
    %335 = vmatpush.msra.mxu0 %v301
    %336 = vmatpush.msra.mxu0 %v297
    %337 = vmatpush.msra.mxu0 %v293
    %338 = vmatpush.msra.mxu0 %v289
    %339 = vmatpush.msra.mxu0 %v285
    %340 = vmatpush.msra.mxu0 %v281
    %341 = vmatpush.msra.mxu0 %v277
    %342 = vmatpush.msra.mxu0 %v273
    %343 = vmatpush.msra.mxu0 %v269
    %344 = vmatpush.msra.mxu0 %v265
    %345 = vmatmul.f32.gmra.mxu0 %v258
    %v346 = vpop.f32.mrf.mxu0
    %v347 = vadd.f32 0.0, %v346
    %348 = vdwg.mxu0
    %349 = vmatpush.msra.mxu0 %v326
    %350 = vmatpush.msra.mxu0 %v322
    %351 = vmatpush.msra.mxu0 %v318
    %352 = vmatpush.msra.mxu0 %v314
    %353 = vmatpush.msra.mxu0 %v310
    %354 = vmatpush.msra.mxu0 %v306
    %355 = vmatpush.msra.mxu0 %v302
    %356 = vmatpush.msra.mxu0 %v298
    %357 = vmatpush.msra.mxu0 %v294
    %358 = vmatpush.msra.mxu0 %v290
    %359 = vmatpush.msra.mxu0 %v286
    %360 = vmatpush.msra.mxu0 %v282
    %361 = vmatpush.msra.mxu0 %v278
    %362 = vmatpush.msra.mxu0 %v274
    %363 = vmatpush.msra.mxu0 %v270
    %364 = vmatpush.msra.mxu0 %v266
    %365 = vmatmul.f32.gmra.mxu0 %v258
    %v366 = vpop.f32.mrf.mxu0
    %v367 = vadd.f32 0.0, %v366
    %368 = vdwg.mxu0
    %369 = vmatpush.msra.mxu0 %v327
    %370 = vmatpush.msra.mxu0 %v323
    %371 = vmatpush.msra.mxu0 %v319
    %372 = vmatpush.msra.mxu0 %v315
    %373 = vmatpush.msra.mxu0 %v311
    %374 = vmatpush.msra.mxu0 %v307
    %375 = vmatpush.msra.mxu0 %v303
    %376 = vmatpush.msra.mxu0 %v299
    %377 = vmatpush.msra.mxu0 %v295
    %378 = vmatpush.msra.mxu0 %v291
    %379 = vmatpush.msra.mxu0 %v287
    %380 = vmatpush.msra.mxu0 %v283
    %381 = vmatpush.msra.mxu0 %v279
    %382 = vmatpush.msra.mxu0 %v275
    %383 = vmatpush.msra.mxu0 %v271
    %384 = vmatpush.msra.mxu0 %v267
    %385 = vmatmul.f32.gmra.mxu0 %v258
    %v386 = vpop.f32.mrf.mxu0
    %v387 = vadd.f32 0.0, %v386
    %388 = vdwg.mxu0
    %389 = vmatpush.msra.mxu0 %v328
    %390 = vmatpush.msra.mxu0 %v324
    %391 = vmatpush.msra.mxu0 %v320
    %392 = vmatpush.msra.mxu0 %v316
    %393 = vmatpush.msra.mxu0 %v312
    %394 = vmatpush.msra.mxu0 %v308
    %395 = vmatpush.msra.mxu0 %v304
    %396 = vmatpush.msra.mxu0 %v300
    %397 = vmatpush.msra.mxu0 %v296
    %398 = vmatpush.msra.mxu0 %v292
    %399 = vmatpush.msra.mxu0 %v288
    %400 = vmatpush.msra.mxu0 %v284
    %401 = vmatpush.msra.mxu0 %v280
    %402 = vmatpush.msra.mxu0 %v276
    %403 = vmatpush.msra.mxu0 %v272
    %404 = vmatpush.msra.mxu0 %v268
    %405 = vmatmul.f32.gmra.mxu0 %v258
    %v406 = vpop.f32.mrf.mxu0
    %v407 = vadd.f32 0.0, %v406
    %408 = vdwg.mxu0
    %v409 = vadd.f32 %v261, %v347
    %v410 = vadd.f32 %v262, %v367
    %v411 = vadd.f32 %v263, %v387
    %v412 = vadd.f32 %v264, %v407
    %v413 = vxor.u32 %v409, 2147483648
    %v414 = vmul.f32 %v413, 1.442695
    %v415 = vpow.pop %v414
    %v416 = vadd.f32 %v415, 1.0
    %v417 = vrcp.pop %v416
    %v418 = vmul.f32 %v416, %v417
    %v419 = vsub.f32 1.0, %v418
    %v420 = vmul.f32 %v417, %v419
    %v421 = vadd.f32 %v417, %v420
    %vm422 = vweird.f32 %v416
    %vm423 = vweird.f32 %v417
    %vm424 = vmor %vm422, %vm423
    %v425 = vsel %vm424, %v417, %v421
    %v426 = vand.u32 2147483647, %v416
    %vm427 = vcmp.eq.f32.partialorder %v426, 8.507059e+37
    %v428 = vand.u32 %v416, 2147483648
    %v429 = vor.u32 1.1754944e-38, %v428
    %v430 = vsel %vm427, %v429, %v425
    %v431 = vmul.f32 1.0, %v430
    %v432 = vxor.u32 %v410, 2147483648
    %v433 = vmul.f32 %v432, 1.442695
    %v434 = vpow.pop %v433
    %v435 = vadd.f32 %v434, 1.0
    %v436 = vrcp.pop %v435
    %v437 = vmul.f32 %v435, %v436
    %v438 = vsub.f32 1.0, %v437
    %v439 = vmul.f32 %v436, %v438
    %v440 = vadd.f32 %v436, %v439
    %vm441 = vweird.f32 %v435
    %vm442 = vweird.f32 %v436
    %vm443 = vmor %vm441, %vm442
    %v444 = vsel %vm443, %v436, %v440
    %v445 = vand.u32 2147483647, %v435
    %vm446 = vcmp.eq.f32.partialorder %v445, 8.507059e+37
    %v447 = vand.u32 %v435, 2147483648
    %v448 = vor.u32 1.1754944e-38, %v447
    %v449 = vsel %vm446, %v448, %v444
    %v450 = vmul.f32 1.0, %v449
    %v451 = vtanh.pop %v411
    %v452 = vxor.u32 %v412, 2147483648
    %v453 = vmul.f32 %v452, 1.442695
    %v454 = vpow.pop %v453
    %v455 = vadd.f32 %v454, 1.0
    %v456 = vrcp.pop %v455
    %v457 = vmul.f32 %v455, %v456
    %v458 = vsub.f32 1.0, %v457
    %v459 = vmul.f32 %v456, %v458
    %v460 = vadd.f32 %v456, %v459
    %vm461 = vweird.f32 %v455
    %vm462 = vweird.f32 %v456
    %vm463 = vmor %vm461, %vm462
    %v464 = vsel %vm463, %v456, %v460
    %v465 = vand.u32 2147483647, %v455
    %vm466 = vcmp.eq.f32.partialorder %v465, 8.507059e+37
    %v467 = vand.u32 %v455, 2147483648
    %v468 = vor.u32 1.1754944e-38, %v467
    %v469 = vsel %vm466, %v468, %v464
    %v470 = vmul.f32 1.0, %v469
    %v471 = vmul.f32 %v450, %v256
    %v472 = vmul.f32 %v431, %v451
    %v473 = vadd.f32 %v471, %v472
    %v474 = vtanh.pop %v473
    %v475 = vmul.f32 %v470, %v474
    %s476 = scalar_lea.vmem [#allocation7], 8
    %477 = vst [vmem:[%s476] sm:$0xff] %v475
    %s478 = scalar_lea.vmem [#allocation2], 64
    %v479 = vld [vmem:[%s478] sm:$0xff]
    %v480 = vld [vmem:[%s478 + $0x8] sm:$0xff]
    %v481 = vld [vmem:[%s478 + $0x10] sm:$0xff]
    %v482 = vld [vmem:[%s478 + $0x18] sm:$0xff]
    %v483 = vld [vmem:[#allocation5] sm:$0xff]
    %v484 = vld [vmem:[#allocation5 + $0x8] sm:$0xff]
    %v485 = vld [vmem:[#allocation5 + $0x10] sm:$0xff]
    %v486 = vld [vmem:[#allocation5 + $0x18] sm:$0xff]
    %v487 = vld [vmem:[#allocation5 + $0x20] sm:$0xff]
    %v488 = vld [vmem:[#allocation5 + $0x28] sm:$0xff]
    %v489 = vld [vmem:[#allocation5 + $0x30] sm:$0xff]
    %v490 = vld [vmem:[#allocation5 + $0x38] sm:$0xff]
    %v491 = vld [vmem:[#allocation5 + $0x40] sm:$0xff]
    %v492 = vld [vmem:[#allocation5 + $0x48] sm:$0xff]
    %v493 = vld [vmem:[#allocation5 + $0x50] sm:$0xff]
    %v494 = vld [vmem:[#allocation5 + $0x58] sm:$0xff]
    %v495 = vld [vmem:[#allocation5 + $0x60] sm:$0xff]
    %v496 = vld [vmem:[#allocation5 + $0x68] sm:$0xff]
    %v497 = vld [vmem:[#allocation5 + $0x70] sm:$0xff]
    %v498 = vld [vmem:[#allocation5 + $0x78] sm:$0xff]
    %v499 = vld [vmem:[#allocation5 + $0x80] sm:$0xff]
    %v500 = vld [vmem:[#allocation5 + $0x88] sm:$0xff]
    %v501 = vld [vmem:[#allocation5 + $0x90] sm:$0xff]
    %v502 = vld [vmem:[#allocation5 + $0x98] sm:$0xff]
    %v503 = vld [vmem:[#allocation5 + $0xa0] sm:$0xff]
    %v504 = vld [vmem:[#allocation5 + $0xa8] sm:$0xff]
    %v505 = vld [vmem:[#allocation5 + $0xb0] sm:$0xff]
    %v506 = vld [vmem:[#allocation5 + $0xb8] sm:$0xff]
    %v507 = vld [vmem:[#allocation5 + $0xc0] sm:$0xff]
    %v508 = vld [vmem:[#allocation5 + $0xc8] sm:$0xff]
    %v509 = vld [vmem:[#allocation5 + $0xd0] sm:$0xff]
    %v510 = vld [vmem:[#allocation5 + $0xd8] sm:$0xff]
    %v511 = vld [vmem:[#allocation5 + $0xe0] sm:$0xff]
    %v512 = vld [vmem:[#allocation5 + $0xe8] sm:$0xff]
    %v513 = vld [vmem:[#allocation5 + $0xf0] sm:$0xff]
    %v514 = vld [vmem:[#allocation5 + $0xf8] sm:$0xff]
    %v515 = vld [vmem:[#allocation5 + $0x100] sm:$0xff]
    %v516 = vld [vmem:[#allocation5 + $0x108] sm:$0xff]
    %v517 = vld [vmem:[#allocation5 + $0x110] sm:$0xff]
    %v518 = vld [vmem:[#allocation5 + $0x118] sm:$0xff]
    %v519 = vld [vmem:[#allocation5 + $0x120] sm:$0xff]
    %v520 = vld [vmem:[#allocation5 + $0x128] sm:$0xff]
    %v521 = vld [vmem:[#allocation5 + $0x130] sm:$0xff]
    %v522 = vld [vmem:[#allocation5 + $0x138] sm:$0xff]
    %v523 = vld [vmem:[#allocation5 + $0x140] sm:$0xff]
    %v524 = vld [vmem:[#allocation5 + $0x148] sm:$0xff]
    %v525 = vld [vmem:[#allocation5 + $0x150] sm:$0xff]
    %v526 = vld [vmem:[#allocation5 + $0x158] sm:$0xff]
    %v527 = vld [vmem:[#allocation5 + $0x160] sm:$0xff]
    %v528 = vld [vmem:[#allocation5 + $0x168] sm:$0xff]
    %v529 = vld [vmem:[#allocation5 + $0x170] sm:$0xff]
    %v530 = vld [vmem:[#allocation5 + $0x178] sm:$0xff]
    %v531 = vld [vmem:[#allocation5 + $0x180] sm:$0xff]
    %v532 = vld [vmem:[#allocation5 + $0x188] sm:$0xff]
    %v533 = vld [vmem:[#allocation5 + $0x190] sm:$0xff]
    %v534 = vld [vmem:[#allocation5 + $0x198] sm:$0xff]
    %v535 = vld [vmem:[#allocation5 + $0x1a0] sm:$0xff]
    %v536 = vld [vmem:[#allocation5 + $0x1a8] sm:$0xff]
    %v537 = vld [vmem:[#allocation5 + $0x1b0] sm:$0xff]
    %v538 = vld [vmem:[#allocation5 + $0x1b8] sm:$0xff]
    %v539 = vld [vmem:[#allocation5 + $0x1c0] sm:$0xff]
    %v540 = vld [vmem:[#allocation5 + $0x1c8] sm:$0xff]
    %v541 = vld [vmem:[#allocation5 + $0x1d0] sm:$0xff]
    %v542 = vld [vmem:[#allocation5 + $0x1d8] sm:$0xff]
    %v543 = vld [vmem:[#allocation5 + $0x1e0] sm:$0xff]
    %v544 = vld [vmem:[#allocation5 + $0x1e8] sm:$0xff]
    %v545 = vld [vmem:[#allocation5 + $0x1f0] sm:$0xff]
    %v546 = vld [vmem:[#allocation5 + $0x1f8] sm:$0xff]
    %547 = vmatpush.msra.mxu0 %v543
    %548 = vmatpush.msra.mxu0 %v539
    %549 = vmatpush.msra.mxu0 %v535
    %550 = vmatpush.msra.mxu0 %v531
    %551 = vmatpush.msra.mxu0 %v527
    %552 = vmatpush.msra.mxu0 %v523
    %553 = vmatpush.msra.mxu0 %v519
    %554 = vmatpush.msra.mxu0 %v515
    %555 = vmatpush.msra.mxu0 %v511
    %556 = vmatpush.msra.mxu0 %v507
    %557 = vmatpush.msra.mxu0 %v503
    %558 = vmatpush.msra.mxu0 %v499
    %559 = vmatpush.msra.mxu0 %v495
    %560 = vmatpush.msra.mxu0 %v491
    %561 = vmatpush.msra.mxu0 %v487
    %562 = vmatpush.msra.mxu0 %v483
    %563 = vmatmul.f32.gmra.mxu0 %v475
    %v564 = vpop.f32.mrf.mxu0
    %v565 = vadd.f32 0.0, %v564
    %566 = vdwg.mxu0
    %567 = vmatpush.msra.mxu0 %v544
    %568 = vmatpush.msra.mxu0 %v540
    %569 = vmatpush.msra.mxu0 %v536
    %570 = vmatpush.msra.mxu0 %v532
    %571 = vmatpush.msra.mxu0 %v528
    %572 = vmatpush.msra.mxu0 %v524
    %573 = vmatpush.msra.mxu0 %v520
    %574 = vmatpush.msra.mxu0 %v516
    %575 = vmatpush.msra.mxu0 %v512
    %576 = vmatpush.msra.mxu0 %v508
    %577 = vmatpush.msra.mxu0 %v504
    %578 = vmatpush.msra.mxu0 %v500
    %579 = vmatpush.msra.mxu0 %v496
    %580 = vmatpush.msra.mxu0 %v492
    %581 = vmatpush.msra.mxu0 %v488
    %582 = vmatpush.msra.mxu0 %v484
    %583 = vmatmul.f32.gmra.mxu0 %v475
    %v584 = vpop.f32.mrf.mxu0
    %v585 = vadd.f32 0.0, %v584
    %586 = vdwg.mxu0
    %587 = vmatpush.msra.mxu0 %v545
    %588 = vmatpush.msra.mxu0 %v541
    %589 = vmatpush.msra.mxu0 %v537
    %590 = vmatpush.msra.mxu0 %v533
    %591 = vmatpush.msra.mxu0 %v529
    %592 = vmatpush.msra.mxu0 %v525
    %593 = vmatpush.msra.mxu0 %v521
    %594 = vmatpush.msra.mxu0 %v517
    %595 = vmatpush.msra.mxu0 %v513
    %596 = vmatpush.msra.mxu0 %v509
    %597 = vmatpush.msra.mxu0 %v505
    %598 = vmatpush.msra.mxu0 %v501
    %599 = vmatpush.msra.mxu0 %v497
    %600 = vmatpush.msra.mxu0 %v493
    %601 = vmatpush.msra.mxu0 %v489
    %602 = vmatpush.msra.mxu0 %v485
    %603 = vmatmul.f32.gmra.mxu0 %v475
    %v604 = vpop.f32.mrf.mxu0
    %v605 = vadd.f32 0.0, %v604
    %606 = vdwg.mxu0
    %607 = vmatpush.msra.mxu0 %v546
    %608 = vmatpush.msra.mxu0 %v542
    %609 = vmatpush.msra.mxu0 %v538
    %610 = vmatpush.msra.mxu0 %v534
    %611 = vmatpush.msra.mxu0 %v530
    %612 = vmatpush.msra.mxu0 %v526
    %613 = vmatpush.msra.mxu0 %v522
    %614 = vmatpush.msra.mxu0 %v518
    %615 = vmatpush.msra.mxu0 %v514
    %616 = vmatpush.msra.mxu0 %v510
    %617 = vmatpush.msra.mxu0 %v506
    %618 = vmatpush.msra.mxu0 %v502
    %619 = vmatpush.msra.mxu0 %v498
    %620 = vmatpush.msra.mxu0 %v494
    %621 = vmatpush.msra.mxu0 %v490
    %622 = vmatpush.msra.mxu0 %v486
    %623 = vmatmul.f32.gmra.mxu0 %v475
    %v624 = vpop.f32.mrf.mxu0
    %v625 = vadd.f32 0.0, %v624
    %626 = vdwg.mxu0
    %v627 = vadd.f32 %v479, %v565
    %v628 = vadd.f32 %v480, %v585
    %v629 = vadd.f32 %v481, %v605
    %v630 = vadd.f32 %v482, %v625
    %v631 = vxor.u32 %v627, 2147483648
    %v632 = vmul.f32 %v631, 1.442695
    %v633 = vpow.pop %v632
    %v634 = vadd.f32 %v633, 1.0
    %v635 = vrcp.pop %v634
    %v636 = vmul.f32 %v634, %v635
    %v637 = vsub.f32 1.0, %v636
    %v638 = vmul.f32 %v635, %v637
    %v639 = vadd.f32 %v635, %v638
    %vm640 = vweird.f32 %v634
    %vm641 = vweird.f32 %v635
    %vm642 = vmor %vm640, %vm641
    %v643 = vsel %vm642, %v635, %v639
    %v644 = vand.u32 2147483647, %v634
    %vm645 = vcmp.eq.f32.partialorder %v644, 8.507059e+37
    %v646 = vand.u32 %v634, 2147483648
    %v647 = vor.u32 1.1754944e-38, %v646
    %v648 = vsel %vm645, %v647, %v643
    %v649 = vmul.f32 1.0, %v648
    %v650 = vxor.u32 %v628, 2147483648
    %v651 = vmul.f32 %v650, 1.442695
    %v652 = vpow.pop %v651
    %v653 = vadd.f32 %v652, 1.0
    %v654 = vrcp.pop %v653
    %v655 = vmul.f32 %v653, %v654
    %v656 = vsub.f32 1.0, %v655
    %v657 = vmul.f32 %v654, %v656
    %v658 = vadd.f32 %v654, %v657
    %vm659 = vweird.f32 %v653
    %vm660 = vweird.f32 %v654
    %vm661 = vmor %vm659, %vm660
    %v662 = vsel %vm661, %v654, %v658
    %v663 = vand.u32 2147483647, %v653
    %vm664 = vcmp.eq.f32.partialorder %v663, 8.507059e+37
    %v665 = vand.u32 %v653, 2147483648
    %v666 = vor.u32 1.1754944e-38, %v665
    %v667 = vsel %vm664, %v666, %v662
    %v668 = vmul.f32 1.0, %v667
    %v669 = vtanh.pop %v629
    %v670 = vxor.u32 %v630, 2147483648
    %v671 = vmul.f32 %v670, 1.442695
    %v672 = vpow.pop %v671
    %v673 = vadd.f32 %v672, 1.0
    %v674 = vrcp.pop %v673
    %v675 = vmul.f32 %v673, %v674
    %v676 = vsub.f32 1.0, %v675
    %v677 = vmul.f32 %v674, %v676
    %v678 = vadd.f32 %v674, %v677
    %vm679 = vweird.f32 %v673
    %vm680 = vweird.f32 %v674
    %vm681 = vmor %vm679, %vm680
    %v682 = vsel %vm681, %v674, %v678
    %v683 = vand.u32 2147483647, %v673
    %vm684 = vcmp.eq.f32.partialorder %v683, 8.507059e+37
    %v685 = vand.u32 %v673, 2147483648
    %v686 = vor.u32 1.1754944e-38, %v685
    %v687 = vsel %vm684, %v686, %v682
    %v688 = vmul.f32 1.0, %v687
    %v689 = vmul.f32 %v668, %v473
    %v690 = vmul.f32 %v649, %v669
    %v691 = vadd.f32 %v689, %v690
    %v692 = vtanh.pop %v691
    %v693 = vmul.f32 %v688, %v692
    %s694 = scalar_lea.vmem [#allocation7], 16
    %695 = vst [vmem:[%s694] sm:$0xff] %v693
    %s696 = scalar_lea.vmem [#allocation2], 96
    %v697 = vld [vmem:[%s696] sm:$0xff]
    %v698 = vld [vmem:[%s696 + $0x8] sm:$0xff]
    %v699 = vld [vmem:[%s696 + $0x10] sm:$0xff]
    %v700 = vld [vmem:[%s696 + $0x18] sm:$0xff]
    %v701 = vld [vmem:[#allocation5] sm:$0xff]
    %v702 = vld [vmem:[#allocation5 + $0x8] sm:$0xff]
    %v703 = vld [vmem:[#allocation5 + $0x10] sm:$0xff]
    %v704 = vld [vmem:[#allocation5 + $0x18] sm:$0xff]
    %v705 = vld [vmem:[#allocation5 + $0x20] sm:$0xff]
    %v706 = vld [vmem:[#allocation5 + $0x28] sm:$0xff]
    %v707 = vld [vmem:[#allocation5 + $0x30] sm:$0xff]
    %v708 = vld [vmem:[#allocation5 + $0x38] sm:$0xff]
    %v709 = vld [vmem:[#allocation5 + $0x40] sm:$0xff]
    %v710 = vld [vmem:[#allocation5 + $0x48] sm:$0xff]
    %v711 = vld [vmem:[#allocation5 + $0x50] sm:$0xff]
    %v712 = vld [vmem:[#allocation5 + $0x58] sm:$0xff]
    %v713 = vld [vmem:[#allocation5 + $0x60] sm:$0xff]
    %v714 = vld [vmem:[#allocation5 + $0x68] sm:$0xff]
    %v715 = vld [vmem:[#allocation5 + $0x70] sm:$0xff]
    %v716 = vld [vmem:[#allocation5 + $0x78] sm:$0xff]
    %v717 = vld [vmem:[#allocation5 + $0x80] sm:$0xff]
    %v718 = vld [vmem:[#allocation5 + $0x88] sm:$0xff]
    %v719 = vld [vmem:[#allocation5 + $0x90] sm:$0xff]
    %v720 = vld [vmem:[#allocation5 + $0x98] sm:$0xff]
    %v721 = vld [vmem:[#allocation5 + $0xa0] sm:$0xff]
    %v722 = vld [vmem:[#allocation5 + $0xa8] sm:$0xff]
    %v723 = vld [vmem:[#allocation5 + $0xb0] sm:$0xff]
    %v724 = vld [vmem:[#allocation5 + $0xb8] sm:$0xff]
    %v725 = vld [vmem:[#allocation5 + $0xc0] sm:$0xff]
    %v726 = vld [vmem:[#allocation5 + $0xc8] sm:$0xff]
    %v727 = vld [vmem:[#allocation5 + $0xd0] sm:$0xff]
    %v728 = vld [vmem:[#allocation5 + $0xd8] sm:$0xff]
    %v729 = vld [vmem:[#allocation5 + $0xe0] sm:$0xff]
    %v730 = vld [vmem:[#allocation5 + $0xe8] sm:$0xff]
    %v731 = vld [vmem:[#allocation5 + $0xf0] sm:$0xff]
    %v732 = vld [vmem:[#allocation5 + $0xf8] sm:$0xff]
    %v733 = vld [vmem:[#allocation5 + $0x100] sm:$0xff]
    %v734 = vld [vmem:[#allocation5 + $0x108] sm:$0xff]
    %v735 = vld [vmem:[#allocation5 + $0x110] sm:$0xff]
    %v736 = vld [vmem:[#allocation5 + $0x118] sm:$0xff]
    %v737 = vld [vmem:[#allocation5 + $0x120] sm:$0xff]
    %v738 = vld [vmem:[#allocation5 + $0x128] sm:$0xff]
    %v739 = vld [vmem:[#allocation5 + $0x130] sm:$0xff]
    %v740 = vld [vmem:[#allocation5 + $0x138] sm:$0xff]
    %v741 = vld [vmem:[#allocation5 + $0x140] sm:$0xff]
    %v742 = vld [vmem:[#allocation5 + $0x148] sm:$0xff]
    %v743 = vld [vmem:[#allocation5 + $0x150] sm:$0xff]
    %v744 = vld [vmem:[#allocation5 + $0x158] sm:$0xff]
    %v745 = vld [vmem:[#allocation5 + $0x160] sm:$0xff]
    %v746 = vld [vmem:[#allocation5 + $0x168] sm:$0xff]
    %v747 = vld [vmem:[#allocation5 + $0x170] sm:$0xff]
    %v748 = vld [vmem:[#allocation5 + $0x178] sm:$0xff]
    %v749 = vld [vmem:[#allocation5 + $0x180] sm:$0xff]
    %v750 = vld [vmem:[#allocation5 + $0x188] sm:$0xff]
    %v751 = vld [vmem:[#allocation5 + $0x190] sm:$0xff]
    %v752 = vld [vmem:[#allocation5 + $0x198] sm:$0xff]
    %v753 = vld [vmem:[#allocation5 + $0x1a0] sm:$0xff]
    %v754 = vld [vmem:[#allocation5 + $0x1a8] sm:$0xff]
    %v755 = vld [vmem:[#allocation5 + $0x1b0] sm:$0xff]
    %v756 = vld [vmem:[#allocation5 + $0x1b8] sm:$0xff]
    %v757 = vld [vmem:[#allocation5 + $0x1c0] sm:$0xff]
    %v758 = vld [vmem:[#allocation5 + $0x1c8] sm:$0xff]
    %v759 = vld [vmem:[#allocation5 + $0x1d0] sm:$0xff]
    %v760 = vld [vmem:[#allocation5 + $0x1d8] sm:$0xff]
    %v761 = vld [vmem:[#allocation5 + $0x1e0] sm:$0xff]
    %v762 = vld [vmem:[#allocation5 + $0x1e8] sm:$0xff]
    %v763 = vld [vmem:[#allocation5 + $0x1f0] sm:$0xff]
    %v764 = vld [vmem:[#allocation5 + $0x1f8] sm:$0xff]
    %765 = vmatpush.msra.mxu0 %v761
    %766 = vmatpush.msra.mxu0 %v757
    %767 = vmatpush.msra.mxu0 %v753
    %768 = vmatpush.msra.mxu0 %v749
    %769 = vmatpush.msra.mxu0 %v745
    %770 = vmatpush.msra.mxu0 %v741
    %771 = vmatpush.msra.mxu0 %v737
    %772 = vmatpush.msra.mxu0 %v733
    %773 = vmatpush.msra.mxu0 %v729
    %774 = vmatpush.msra.mxu0 %v725
    %775 = vmatpush.msra.mxu0 %v721
    %776 = vmatpush.msra.mxu0 %v717
    %777 = vmatpush.msra.mxu0 %v713
    %778 = vmatpush.msra.mxu0 %v709
    %779 = vmatpush.msra.mxu0 %v705
    %780 = vmatpush.msra.mxu0 %v701
    %781 = vmatmul.f32.gmra.mxu0 %v693
    %v782 = vpop.f32.mrf.mxu0
    %v783 = vadd.f32 0.0, %v782
    %784 = vdwg.mxu0
    %785 = vmatpush.msra.mxu0 %v762
    %786 = vmatpush.msra.mxu0 %v758
    %787 = vmatpush.msra.mxu0 %v754
    %788 = vmatpush.msra.mxu0 %v750
    %789 = vmatpush.msra.mxu0 %v746
    %790 = vmatpush.msra.mxu0 %v742
    %791 = vmatpush.msra.mxu0 %v738
    %792 = vmatpush.msra.mxu0 %v734
    %793 = vmatpush.msra.mxu0 %v730
    %794 = vmatpush.msra.mxu0 %v726
    %795 = vmatpush.msra.mxu0 %v722
    %796 = vmatpush.msra.mxu0 %v718
    %797 = vmatpush.msra.mxu0 %v714
    %798 = vmatpush.msra.mxu0 %v710
    %799 = vmatpush.msra.mxu0 %v706
    %800 = vmatpush.msra.mxu0 %v702
    %801 = vmatmul.f32.gmra.mxu0 %v693
    %v802 = vpop.f32.mrf.mxu0
    %v803 = vadd.f32 0.0, %v802
    %804 = vdwg.mxu0
    %805 = vmatpush.msra.mxu0 %v763
    %806 = vmatpush.msra.mxu0 %v759
    %807 = vmatpush.msra.mxu0 %v755
    %808 = vmatpush.msra.mxu0 %v751
    %809 = vmatpush.msra.mxu0 %v747
    %810 = vmatpush.msra.mxu0 %v743
    %811 = vmatpush.msra.mxu0 %v739
    %812 = vmatpush.msra.mxu0 %v735
    %813 = vmatpush.msra.mxu0 %v731
    %814 = vmatpush.msra.mxu0 %v727
    %815 = vmatpush.msra.mxu0 %v723
    %816 = vmatpush.msra.mxu0 %v719
    %817 = vmatpush.msra.mxu0 %v715
    %818 = vmatpush.msra.mxu0 %v711
    %819 = vmatpush.msra.mxu0 %v707
    %820 = vmatpush.msra.mxu0 %v703
    %821 = vmatmul.f32.gmra.mxu0 %v693
    %v822 = vpop.f32.mrf.mxu0
    %v823 = vadd.f32 0.0, %v822
    %824 = vdwg.mxu0
    %825 = vmatpush.msra.mxu0 %v764
    %826 = vmatpush.msra.mxu0 %v760
    %827 = vmatpush.msra.mxu0 %v756
    %828 = vmatpush.msra.mxu0 %v752
    %829 = vmatpush.msra.mxu0 %v748
    %830 = vmatpush.msra.mxu0 %v744
    %831 = vmatpush.msra.mxu0 %v740
    %832 = vmatpush.msra.mxu0 %v736
    %833 = vmatpush.msra.mxu0 %v732
    %834 = vmatpush.msra.mxu0 %v728
    %835 = vmatpush.msra.mxu0 %v724
    %836 = vmatpush.msra.mxu0 %v720
    %837 = vmatpush.msra.mxu0 %v716
    %838 = vmatpush.msra.mxu0 %v712
    %839 = vmatpush.msra.mxu0 %v708
    %840 = vmatpush.msra.mxu0 %v704
    %841 = vmatmul.f32.gmra.mxu0 %v693
    %v842 = vpop.f32.mrf.mxu0
    %v843 = vadd.f32 0.0, %v842
    %844 = vdwg.mxu0
    %v845 = vadd.f32 %v697, %v783
    %v846 = vadd.f32 %v698, %v803
    %v847 = vadd.f32 %v699, %v823
    %v848 = vadd.f32 %v700, %v843
    %v849 = vxor.u32 %v845, 2147483648
    %v850 = vmul.f32 %v849, 1.442695
    %v851 = vpow.pop %v850
    %v852 = vadd.f32 %v851, 1.0
    %v853 = vrcp.pop %v852
    %v854 = vmul.f32 %v852, %v853
    %v855 = vsub.f32 1.0, %v854
    %v856 = vmul.f32 %v853, %v855
    %v857 = vadd.f32 %v853, %v856
    %vm858 = vweird.f32 %v852
    %vm859 = vweird.f32 %v853
    %vm860 = vmor %vm858, %vm859
    %v861 = vsel %vm860, %v853, %v857
    %v862 = vand.u32 2147483647, %v852
    %vm863 = vcmp.eq.f32.partialorder %v862, 8.507059e+37
    %v864 = vand.u32 %v852, 2147483648
    %v865 = vor.u32 1.1754944e-38, %v864
    %v866 = vsel %vm863, %v865, %v861
    %v867 = vmul.f32 1.0, %v866
    %v868 = vxor.u32 %v846, 2147483648
    %v869 = vmul.f32 %v868, 1.442695
    %v870 = vpow.pop %v869
    %v871 = vadd.f32 %v870, 1.0
    %v872 = vrcp.pop %v871
    %v873 = vmul.f32 %v871, %v872
    %v874 = vsub.f32 1.0, %v873
    %v875 = vmul.f32 %v872, %v874
    %v876 = vadd.f32 %v872, %v875
    %vm877 = vweird.f32 %v871
    %vm878 = vweird.f32 %v872
    %vm879 = vmor %vm877, %vm878
    %v880 = vsel %vm879, %v872, %v876
    %v881 = vand.u32 2147483647, %v871
    %vm882 = vcmp.eq.f32.partialorder %v881, 8.507059e+37
    %v883 = vand.u32 %v871, 2147483648
    %v884 = vor.u32 1.1754944e-38, %v883
    %v885 = vsel %vm882, %v884, %v880
    %v886 = vmul.f32 1.0, %v885
    %v887 = vtanh.pop %v847
    %v888 = vxor.u32 %v848, 2147483648
    %v889 = vmul.f32 %v888, 1.442695
    %v890 = vpow.pop %v889
    %v891 = vadd.f32 %v890, 1.0
    %v892 = vrcp.pop %v891
    %v893 = vmul.f32 %v891, %v892
    %v894 = vsub.f32 1.0, %v893
    %v895 = vmul.f32 %v892, %v894
    %v896 = vadd.f32 %v892, %v895
    %vm897 = vweird.f32 %v891
    %vm898 = vweird.f32 %v892
    %vm899 = vmor %vm897, %vm898
    %v900 = vsel %vm899, %v892, %v896
    %v901 = vand.u32 2147483647, %v891
    %vm902 = vcmp.eq.f32.partialorder %v901, 8.507059e+37
    %v903 = vand.u32 %v891, 2147483648
    %v904 = vor.u32 1.1754944e-38, %v903
    %v905 = vsel %vm902, %v904, %v900
    %v906 = vmul.f32 1.0, %v905
    %v907 = vmul.f32 %v886, %v691
    %v908 = vmul.f32 %v867, %v887
    %v909 = vadd.f32 %v907, %v908
    %v910 = vtanh.pop %v909
    %v911 = vmul.f32 %v906, %v910
    %s912 = scalar_lea.vmem [#allocation7], 24
    %913 = vst [vmem:[%s912] sm:$0xff] %v911
    %s914 = scalar_lea.vmem [#allocation2], 128
    %v915 = vld [vmem:[%s914] sm:$0xff]
    %v916 = vld [vmem:[%s914 + $0x8] sm:$0xff]
    %v917 = vld [vmem:[%s914 + $0x10] sm:$0xff]
    %v918 = vld [vmem:[%s914 + $0x18] sm:$0xff]
    %v919 = vld [vmem:[#allocation5] sm:$0xff]
    %v920 = vld [vmem:[#allocation5 + $0x8] sm:$0xff]
    %v921 = vld [vmem:[#allocation5 + $0x10] sm:$0xff]
    %v922 = vld [vmem:[#allocation5 + $0x18] sm:$0xff]
    %v923 = vld [vmem:[#allocation5 + $0x20] sm:$0xff]
    %v924 = vld [vmem:[#allocation5 + $0x28] sm:$0xff]
    %v925 = vld [vmem:[#allocation5 + $0x30] sm:$0xff]
    %v926 = vld [vmem:[#allocation5 + $0x38] sm:$0xff]
    %v927 = vld [vmem:[#allocation5 + $0x40] sm:$0xff]
    %v928 = vld [vmem:[#allocation5 + $0x48] sm:$0xff]
    %v929 = vld [vmem:[#allocation5 + $0x50] sm:$0xff]
    %v930 = vld [vmem:[#allocation5 + $0x58] sm:$0xff]
    %v931 = vld [vmem:[#allocation5 + $0x60] sm:$0xff]
    %v932 = vld [vmem:[#allocation5 + $0x68] sm:$0xff]
    %v933 = vld [vmem:[#allocation5 + $0x70] sm:$0xff]
    %v934 = vld [vmem:[#allocation5 + $0x78] sm:$0xff]
    %v935 = vld [vmem:[#allocation5 + $0x80] sm:$0xff]
    %v936 = vld [vmem:[#allocation5 + $0x88] sm:$0xff]
    %v937 = vld [vmem:[#allocation5 + $0x90] sm:$0xff]
    %v938 = vld [vmem:[#allocation5 + $0x98] sm:$0xff]
    %v939 = vld [vmem:[#allocation5 + $0xa0] sm:$0xff]
    %v940 = vld [vmem:[#allocation5 + $0xa8] sm:$0xff]
    %v941 = vld [vmem:[#allocation5 + $0xb0] sm:$0xff]
    %v942 = vld [vmem:[#allocation5 + $0xb8] sm:$0xff]
    %v943 = vld [vmem:[#allocation5 + $0xc0] sm:$0xff]
    %v944 = vld [vmem:[#allocation5 + $0xc8] sm:$0xff]
    %v945 = vld [vmem:[#allocation5 + $0xd0] sm:$0xff]
    %v946 = vld [vmem:[#allocation5 + $0xd8] sm:$0xff]
    %v947 = vld [vmem:[#allocation5 + $0xe0] sm:$0xff]
    %v948 = vld [vmem:[#allocation5 + $0xe8] sm:$0xff]
    %v949 = vld [vmem:[#allocation5 + $0xf0] sm:$0xff]
    %v950 = vld [vmem:[#allocation5 + $0xf8] sm:$0xff]
    %v951 = vld [vmem:[#allocation5 + $0x100] sm:$0xff]
    %v952 = vld [vmem:[#allocation5 + $0x108] sm:$0xff]
    %v953 = vld [vmem:[#allocation5 + $0x110] sm:$0xff]
    %v954 = vld [vmem:[#allocation5 + $0x118] sm:$0xff]
    %v955 = vld [vmem:[#allocation5 + $0x120] sm:$0xff]
    %v956 = vld [vmem:[#allocation5 + $0x128] sm:$0xff]
    %v957 = vld [vmem:[#allocation5 + $0x130] sm:$0xff]
    %v958 = vld [vmem:[#allocation5 + $0x138] sm:$0xff]
    %v959 = vld [vmem:[#allocation5 + $0x140] sm:$0xff]
    %v960 = vld [vmem:[#allocation5 + $0x148] sm:$0xff]
    %v961 = vld [vmem:[#allocation5 + $0x150] sm:$0xff]
    %v962 = vld [vmem:[#allocation5 + $0x158] sm:$0xff]
    %v963 = vld [vmem:[#allocation5 + $0x160] sm:$0xff]
    %v964 = vld [vmem:[#allocation5 + $0x168] sm:$0xff]
    %v965 = vld [vmem:[#allocation5 + $0x170] sm:$0xff]
    %v966 = vld [vmem:[#allocation5 + $0x178] sm:$0xff]
    %v967 = vld [vmem:[#allocation5 + $0x180] sm:$0xff]
    %v968 = vld [vmem:[#allocation5 + $0x188] sm:$0xff]
    %v969 = vld [vmem:[#allocation5 + $0x190] sm:$0xff]
    %v970 = vld [vmem:[#allocation5 + $0x198] sm:$0xff]
    %v971 = vld [vmem:[#allocation5 + $0x1a0] sm:$0xff]
    %v972 = vld [vmem:[#allocation5 + $0x1a8] sm:$0xff]
    %v973 = vld [vmem:[#allocation5 + $0x1b0] sm:$0xff]
    %v974 = vld [vmem:[#allocation5 + $0x1b8] sm:$0xff]
    %v975 = vld [vmem:[#allocation5 + $0x1c0] sm:$0xff]
    %v976 = vld [vmem:[#allocation5 + $0x1c8] sm:$0xff]
    %v977 = vld [vmem:[#allocation5 + $0x1d0] sm:$0xff]
    %v978 = vld [vmem:[#allocation5 + $0x1d8] sm:$0xff]
    %v979 = vld [vmem:[#allocation5 + $0x1e0] sm:$0xff]
    %v980 = vld [vmem:[#allocation5 + $0x1e8] sm:$0xff]
    %v981 = vld [vmem:[#allocation5 + $0x1f0] sm:$0xff]
    %v982 = vld [vmem:[#allocation5 + $0x1f8] sm:$0xff]
    %983 = vmatpush.msra.mxu0 %v979
    %984 = vmatpush.msra.mxu0 %v975
    %985 = vmatpush.msra.mxu0 %v971
    %986 = vmatpush.msra.mxu0 %v967
    %987 = vmatpush.msra.mxu0 %v963
    %988 = vmatpush.msra.mxu0 %v959
    %989 = vmatpush.msra.mxu0 %v955
    %990 = vmatpush.msra.mxu0 %v951
    %991 = vmatpush.msra.mxu0 %v947
    %992 = vmatpush.msra.mxu0 %v943
    %993 = vmatpush.msra.mxu0 %v939
    %994 = vmatpush.msra.mxu0 %v935
    %995 = vmatpush.msra.mxu0 %v931
    %996 = vmatpush.msra.mxu0 %v927
    %997 = vmatpush.msra.mxu0 %v923
    %998 = vmatpush.msra.mxu0 %v919
    %999 = vmatmul.f32.gmra.mxu0 %v911
    %v1000 = vpop.f32.mrf.mxu0
    %v1001 = vadd.f32 0.0, %v1000
    %1002 = vdwg.mxu0
    %1003 = vmatpush.msra.mxu0 %v980
    %1004 = vmatpush.msra.mxu0 %v976
    %1005 = vmatpush.msra.mxu0 %v972
    %1006 = vmatpush.msra.mxu0 %v968
    %1007 = vmatpush.msra.mxu0 %v964
    %1008 = vmatpush.msra.mxu0 %v960
    %1009 = vmatpush.msra.mxu0 %v956
    %1010 = vmatpush.msra.mxu0 %v952
    %1011 = vmatpush.msra.mxu0 %v948
    %1012 = vmatpush.msra.mxu0 %v944
    %1013 = vmatpush.msra.mxu0 %v940
    %1014 = vmatpush.msra.mxu0 %v936
    %1015 = vmatpush.msra.mxu0 %v932
    %1016 = vmatpush.msra.mxu0 %v928
    %1017 = vmatpush.msra.mxu0 %v924
    %1018 = vmatpush.msra.mxu0 %v920
    %1019 = vmatmul.f32.gmra.mxu0 %v911
    %v1020 = vpop.f32.mrf.mxu0
    %v1021 = vadd.f32 0.0, %v1020
    %1022 = vdwg.mxu0
    %1023 = vmatpush.msra.mxu0 %v981
    %1024 = vmatpush.msra.mxu0 %v977
    %1025 = vmatpush.msra.mxu0 %v973
    %1026 = vmatpush.msra.mxu0 %v969
    %1027 = vmatpush.msra.mxu0 %v965
    %1028 = vmatpush.msra.mxu0 %v961
    %1029 = vmatpush.msra.mxu0 %v957
    %1030 = vmatpush.msra.mxu0 %v953
    %1031 = vmatpush.msra.mxu0 %v949
    %1032 = vmatpush.msra.mxu0 %v945
    %1033 = vmatpush.msra.mxu0 %v941
    %1034 = vmatpush.msra.mxu0 %v937
    %1035 = vmatpush.msra.mxu0 %v933
    %1036 = vmatpush.msra.mxu0 %v929
    %1037 = vmatpush.msra.mxu0 %v925
    %1038 = vmatpush.msra.mxu0 %v921
    %1039 = vmatmul.f32.gmra.mxu0 %v911
    %v1040 = vpop.f32.mrf.mxu0
    %v1041 = vadd.f32 0.0, %v1040
    %1042 = vdwg.mxu0
    %1043 = vmatpush.msra.mxu0 %v982
    %1044 = vmatpush.msra.mxu0 %v978
    %1045 = vmatpush.msra.mxu0 %v974
    %1046 = vmatpush.msra.mxu0 %v970
    %1047 = vmatpush.msra.mxu0 %v966
    %1048 = vmatpush.msra.mxu0 %v962
    %1049 = vmatpush.msra.mxu0 %v958
    %1050 = vmatpush.msra.mxu0 %v954
    %1051 = vmatpush.msra.mxu0 %v950
    %1052 = vmatpush.msra.mxu0 %v946
    %1053 = vmatpush.msra.mxu0 %v942
    %1054 = vmatpush.msra.mxu0 %v938
    %1055 = vmatpush.msra.mxu0 %v934
    %1056 = vmatpush.msra.mxu0 %v930
    %1057 = vmatpush.msra.mxu0 %v926
    %1058 = vmatpush.msra.mxu0 %v922
    %1059 = vmatmul.f32.gmra.mxu0 %v911
    %v1060 = vpop.f32.mrf.mxu0
    %v1061 = vadd.f32 0.0, %v1060
    %1062 = vdwg.mxu0
    %v1063 = vadd.f32 %v915, %v1001
    %v1064 = vadd.f32 %v916, %v1021
    %v1065 = vadd.f32 %v917, %v1041
    %v1066 = vadd.f32 %v918, %v1061
    %v1067 = vxor.u32 %v1063, 2147483648
    %v1068 = vmul.f32 %v1067, 1.442695
    %v1069 = vpow.pop %v1068
    %v1070 = vadd.f32 %v1069, 1.0
    %v1071 = vrcp.pop %v1070
    %v1072 = vmul.f32 %v1070, %v1071
    %v1073 = vsub.f32 1.0, %v1072
    %v1074 = vmul.f32 %v1071, %v1073
    %v1075 = vadd.f32 %v1071, %v1074
    %vm1076 = vweird.f32 %v1070
    %vm1077 = vweird.f32 %v1071
    %vm1078 = vmor %vm1076, %vm1077
    %v1079 = vsel %vm1078, %v1071, %v1075
    %v1080 = vand.u32 2147483647, %v1070
    %vm1081 = vcmp.eq.f32.partialorder %v1080, 8.507059e+37
    %v1082 = vand.u32 %v1070, 2147483648
    %v1083 = vor.u32 1.1754944e-38, %v1082
    %v1084 = vsel %vm1081, %v1083, %v1079
    %v1085 = vmul.f32 1.0, %v1084
    %v1086 = vxor.u32 %v1064, 2147483648
    %v1087 = vmul.f32 %v1086, 1.442695
    %v1088 = vpow.pop %v1087
    %v1089 = vadd.f32 %v1088, 1.0
    %v1090 = vrcp.pop %v1089
    %v1091 = vmul.f32 %v1089, %v1090
    %v1092 = vsub.f32 1.0, %v1091
    %v1093 = vmul.f32 %v1090, %v1092
    %v1094 = vadd.f32 %v1090, %v1093
    %vm1095 = vweird.f32 %v1089
    %vm1096 = vweird.f32 %v1090
    %vm1097 = vmor %vm1095, %vm1096
    %v1098 = vsel %vm1097, %v1090, %v1094
    %v1099 = vand.u32 2147483647, %v1089
    %vm1100 = vcmp.eq.f32.partialorder %v1099, 8.507059e+37
    %v1101 = vand.u32 %v1089, 2147483648
    %v1102 = vor.u32 1.1754944e-38, %v1101
    %v1103 = vsel %vm1100, %v1102, %v1098
    %v1104 = vmul.f32 1.0, %v1103
    %v1105 = vtanh.pop %v1065
    %v1106 = vxor.u32 %v1066, 2147483648
    %v1107 = vmul.f32 %v1106, 1.442695
    %v1108 = vpow.pop %v1107
    %v1109 = vadd.f32 %v1108, 1.0
    %v1110 = vrcp.pop %v1109
    %v1111 = vmul.f32 %v1109, %v1110
    %v1112 = vsub.f32 1.0, %v1111
    %v1113 = vmul.f32 %v1110, %v1112
    %v1114 = vadd.f32 %v1110, %v1113
    %vm1115 = vweird.f32 %v1109
    %vm1116 = vweird.f32 %v1110
    %vm1117 = vmor %vm1115, %vm1116
    %v1118 = vsel %vm1117, %v1110, %v1114
    %v1119 = vand.u32 2147483647, %v1109
    %vm1120 = vcmp.eq.f32.partialorder %v1119, 8.507059e+37
    %v1121 = vand.u32 %v1109, 2147483648
    %v1122 = vor.u32 1.1754944e-38, %v1121
    %v1123 = vsel %vm1120, %v1122, %v1118
    %v1124 = vmul.f32 1.0, %v1123
    %v1125 = vmul.f32 %v1104, %v909
    %v1126 = vmul.f32 %v1085, %v1105
    %v1127 = vadd.f32 %v1125, %v1126
    %v1128 = vtanh.pop %v1127
    %v1129 = vmul.f32 %v1124, %v1128
    %s1130 = scalar_lea.vmem [#allocation7], 32
    %1131 = vst [vmem:[%s1130] sm:$0xff] %v1129
    %s1132 = scalar_lea.vmem [#allocation2], 160
    %v1133 = vld [vmem:[%s1132] sm:$0xff]
    %v1134 = vld [vmem:[%s1132 + $0x8] sm:$0xff]
    %v1135 = vld [vmem:[%s1132 + $0x10] sm:$0xff]
    %v1136 = vld [vmem:[%s1132 + $0x18] sm:$0xff]
    %v1137 = vld [vmem:[#allocation5] sm:$0xff]
    %v1138 = vld [vmem:[#allocation5 + $0x8] sm:$0xff]
    %v1139 = vld [vmem:[#allocation5 + $0x10] sm:$0xff]
    %v1140 = vld [vmem:[#allocation5 + $0x18] sm:$0xff]
    %v1141 = vld [vmem:[#allocation5 + $0x20] sm:$0xff]
    %v1142 = vld [vmem:[#allocation5 + $0x28] sm:$0xff]
    %v1143 = vld [vmem:[#allocation5 + $0x30] sm:$0xff]
    %v1144 = vld [vmem:[#allocation5 + $0x38] sm:$0xff]
    %v1145 = vld [vmem:[#allocation5 + $0x40] sm:$0xff]
    %v1146 = vld [vmem:[#allocation5 + $0x48] sm:$0xff]
    %v1147 = vld [vmem:[#allocation5 + $0x50] sm:$0xff]
    %v1148 = vld [vmem:[#allocation5 + $0x58] sm:$0xff]
    %v1149 = vld [vmem:[#allocation5 + $0x60] sm:$0xff]
    %v1150 = vld [vmem:[#allocation5 + $0x68] sm:$0xff]
    %v1151 = vld [vmem:[#allocation5 + $0x70] sm:$0xff]
    %v1152 = vld [vmem:[#allocation5 + $0x78] sm:$0xff]
    %v1153 = vld [vmem:[#allocation5 + $0x80] sm:$0xff]
    %v1154 = vld [vmem:[#allocation5 + $0x88] sm:$0xff]
    %v1155 = vld [vmem:[#allocation5 + $0x90] sm:$0xff]
    %v1156 = vld [vmem:[#allocation5 + $0x98] sm:$0xff]
    %v1157 = vld [vmem:[#allocation5 + $0xa0] sm:$0xff]
    %v1158 = vld [vmem:[#allocation5 + $0xa8] sm:$0xff]
    %v1159 = vld [vmem:[#allocation5 + $0xb0] sm:$0xff]
    %v1160 = vld [vmem:[#allocation5 + $0xb8] sm:$0xff]
    %v1161 = vld [vmem:[#allocation5 + $0xc0] sm:$0xff]
    %v1162 = vld [vmem:[#allocation5 + $0xc8] sm:$0xff]
    %v1163 = vld [vmem:[#allocation5 + $0xd0] sm:$0xff]
    %v1164 = vld [vmem:[#allocation5 + $0xd8] sm:$0xff]
    %v1165 = vld [vmem:[#allocation5 + $0xe0] sm:$0xff]
    %v1166 = vld [vmem:[#allocation5 + $0xe8] sm:$0xff]
    %v1167 = vld [vmem:[#allocation5 + $0xf0] sm:$0xff]
    %v1168 = vld [vmem:[#allocation5 + $0xf8] sm:$0xff]
    %v1169 = vld [vmem:[#allocation5 + $0x100] sm:$0xff]
    %v1170 = vld [vmem:[#allocation5 + $0x108] sm:$0xff]
    %v1171 = vld [vmem:[#allocation5 + $0x110] sm:$0xff]
    %v1172 = vld [vmem:[#allocation5 + $0x118] sm:$0xff]
    %v1173 = vld [vmem:[#allocation5 + $0x120] sm:$0xff]
    %v1174 = vld [vmem:[#allocation5 + $0x128] sm:$0xff]
    %v1175 = vld [vmem:[#allocation5 + $0x130] sm:$0xff]
    %v1176 = vld [vmem:[#allocation5 + $0x138] sm:$0xff]
    %v1177 = vld [vmem:[#allocation5 + $0x140] sm:$0xff]
    %v1178 = vld [vmem:[#allocation5 + $0x148] sm:$0xff]
    %v1179 = vld [vmem:[#allocation5 + $0x150] sm:$0xff]
    %v1180 = vld [vmem:[#allocation5 + $0x158] sm:$0xff]
    %v1181 = vld [vmem:[#allocation5 + $0x160] sm:$0xff]
    %v1182 = vld [vmem:[#allocation5 + $0x168] sm:$0xff]
    %v1183 = vld [vmem:[#allocation5 + $0x170] sm:$0xff]
    %v1184 = vld [vmem:[#allocation5 + $0x178] sm:$0xff]
    %v1185 = vld [vmem:[#allocation5 + $0x180] sm:$0xff]
    %v1186 = vld [vmem:[#allocation5 + $0x188] sm:$0xff]
    %v1187 = vld [vmem:[#allocation5 + $0x190] sm:$0xff]
    %v1188 = vld [vmem:[#allocation5 + $0x198] sm:$0xff]
    %v1189 = vld [vmem:[#allocation5 + $0x1a0] sm:$0xff]
    %v1190 = vld [vmem:[#allocation5 + $0x1a8] sm:$0xff]
    %v1191 = vld [vmem:[#allocation5 + $0x1b0] sm:$0xff]
    %v1192 = vld [vmem:[#allocation5 + $0x1b8] sm:$0xff]
    %v1193 = vld [vmem:[#allocation5 + $0x1c0] sm:$0xff]
    %v1194 = vld [vmem:[#allocation5 + $0x1c8] sm:$0xff]
    %v1195 = vld [vmem:[#allocation5 + $0x1d0] sm:$0xff]
    %v1196 = vld [vmem:[#allocation5 + $0x1d8] sm:$0xff]
    %v1197 = vld [vmem:[#allocation5 + $0x1e0] sm:$0xff]
    %v1198 = vld [vmem:[#allocation5 + $0x1e8] sm:$0xff]
    %v1199 = vld [vmem:[#allocation5 + $0x1f0] sm:$0xff]
    %v1200 = vld [vmem:[#allocation5 + $0x1f8] sm:$0xff]
    %1201 = vmatpush.msra.mxu0 %v1197
    %1202 = vmatpush.msra.mxu0 %v1193
    %1203 = vmatpush.msra.mxu0 %v1189
    %1204 = vmatpush.msra.mxu0 %v1185
    %1205 = vmatpush.msra.mxu0 %v1181
    %1206 = vmatpush.msra.mxu0 %v1177
    %1207 = vmatpush.msra.mxu0 %v1173
    %1208 = vmatpush.msra.mxu0 %v1169
    %1209 = vmatpush.msra.mxu0 %v1165
    %1210 = vmatpush.msra.mxu0 %v1161
    %1211 = vmatpush.msra.mxu0 %v1157
    %1212 = vmatpush.msra.mxu0 %v1153
    %1213 = vmatpush.msra.mxu0 %v1149
    %1214 = vmatpush.msra.mxu0 %v1145
    %1215 = vmatpush.msra.mxu0 %v1141
    %1216 = vmatpush.msra.mxu0 %v1137
    %1217 = vmatmul.f32.gmra.mxu0 %v1129
    %v1218 = vpop.f32.mrf.mxu0
    %v1219 = vadd.f32 0.0, %v1218
    %1220 = vdwg.mxu0
    %1221 = vmatpush.msra.mxu0 %v1198
    %1222 = vmatpush.msra.mxu0 %v1194
    %1223 = vmatpush.msra.mxu0 %v1190
    %1224 = vmatpush.msra.mxu0 %v1186
    %1225 = vmatpush.msra.mxu0 %v1182
    %1226 = vmatpush.msra.mxu0 %v1178
    %1227 = vmatpush.msra.mxu0 %v1174
    %1228 = vmatpush.msra.mxu0 %v1170
    %1229 = vmatpush.msra.mxu0 %v1166
    %1230 = vmatpush.msra.mxu0 %v1162
    %1231 = vmatpush.msra.mxu0 %v1158
    %1232 = vmatpush.msra.mxu0 %v1154
    %1233 = vmatpush.msra.mxu0 %v1150
    %1234 = vmatpush.msra.mxu0 %v1146
    %1235 = vmatpush.msra.mxu0 %v1142
    %1236 = vmatpush.msra.mxu0 %v1138
    %1237 = vmatmul.f32.gmra.mxu0 %v1129
    %v1238 = vpop.f32.mrf.mxu0
    %v1239 = vadd.f32 0.0, %v1238
    %1240 = vdwg.mxu0
    %1241 = vmatpush.msra.mxu0 %v1199
    %1242 = vmatpush.msra.mxu0 %v1195
    %1243 = vmatpush.msra.mxu0 %v1191
    %1244 = vmatpush.msra.mxu0 %v1187
    %1245 = vmatpush.msra.mxu0 %v1183
    %1246 = vmatpush.msra.mxu0 %v1179
    %1247 = vmatpush.msra.mxu0 %v1175
    %1248 = vmatpush.msra.mxu0 %v1171
    %1249 = vmatpush.msra.mxu0 %v1167
    %1250 = vmatpush.msra.mxu0 %v1163
    %1251 = vmatpush.msra.mxu0 %v1159
    %1252 = vmatpush.msra.mxu0 %v1155
    %1253 = vmatpush.msra.mxu0 %v1151
    %1254 = vmatpush.msra.mxu0 %v1147
    %1255 = vmatpush.msra.mxu0 %v1143
    %1256 = vmatpush.msra.mxu0 %v1139
    %1257 = vmatmul.f32.gmra.mxu0 %v1129
    %v1258 = vpop.f32.mrf.mxu0
    %v1259 = vadd.f32 0.0, %v1258
    %1260 = vdwg.mxu0
    %1261 = vmatpush.msra.mxu0 %v1200
    %1262 = vmatpush.msra.mxu0 %v1196
    %1263 = vmatpush.msra.mxu0 %v1192
    %1264 = vmatpush.msra.mxu0 %v1188
    %1265 = vmatpush.msra.mxu0 %v1184
    %1266 = vmatpush.msra.mxu0 %v1180
    %1267 = vmatpush.msra.mxu0 %v1176
    %1268 = vmatpush.msra.mxu0 %v1172
    %1269 = vmatpush.msra.mxu0 %v1168
    %1270 = vmatpush.msra.mxu0 %v1164
    %1271 = vmatpush.msra.mxu0 %v1160
    %1272 = vmatpush.msra.mxu0 %v1156
    %1273 = vmatpush.msra.mxu0 %v1152
    %1274 = vmatpush.msra.mxu0 %v1148
    %1275 = vmatpush.msra.mxu0 %v1144
    %1276 = vmatpush.msra.mxu0 %v1140
    %1277 = vmatmul.f32.gmra.mxu0 %v1129
    %v1278 = vpop.f32.mrf.mxu0
    %v1279 = vadd.f32 0.0, %v1278
    %1280 = vdwg.mxu0
    %v1281 = vadd.f32 %v1133, %v1219
    %v1282 = vadd.f32 %v1134, %v1239
    %v1283 = vadd.f32 %v1135, %v1259
    %v1284 = vadd.f32 %v1136, %v1279
    %v1285 = vxor.u32 %v1281, 2147483648
    %v1286 = vmul.f32 %v1285, 1.442695
    %v1287 = vpow.pop %v1286
    %v1288 = vadd.f32 %v1287, 1.0
    %v1289 = vrcp.pop %v1288
    %v1290 = vmul.f32 %v1288, %v1289
    %v1291 = vsub.f32 1.0, %v1290
    %v1292 = vmul.f32 %v1289, %v1291
    %v1293 = vadd.f32 %v1289, %v1292
    %vm1294 = vweird.f32 %v1288
    %vm1295 = vweird.f32 %v1289
    %vm1296 = vmor %vm1294, %vm1295
    %v1297 = vsel %vm1296, %v1289, %v1293
    %v1298 = vand.u32 2147483647, %v1288
    %vm1299 = vcmp.eq.f32.partialorder %v1298, 8.507059e+37
    %v1300 = vand.u32 %v1288, 2147483648
    %v1301 = vor.u32 1.1754944e-38, %v1300
    %v1302 = vsel %vm1299, %v1301, %v1297
    %v1303 = vmul.f32 1.0, %v1302
    %v1304 = vxor.u32 %v1282, 2147483648
    %v1305 = vmul.f32 %v1304, 1.442695
    %v1306 = vpow.pop %v1305
    %v1307 = vadd.f32 %v1306, 1.0
    %v1308 = vrcp.pop %v1307
    %v1309 = vmul.f32 %v1307, %v1308
    %v1310 = vsub.f32 1.0, %v1309
    %v1311 = vmul.f32 %v1308, %v1310
    %v1312 = vadd.f32 %v1308, %v1311
    %vm1313 = vweird.f32 %v1307
    %vm1314 = vweird.f32 %v1308
    %vm1315 = vmor %vm1313, %vm1314
    %v1316 = vsel %vm1315, %v1308, %v1312
    %v1317 = vand.u32 2147483647, %v1307
    %vm1318 = vcmp.eq.f32.partialorder %v1317, 8.507059e+37
    %v1319 = vand.u32 %v1307, 2147483648
    %v1320 = vor.u32 1.1754944e-38, %v1319
    %v1321 = vsel %vm1318, %v1320, %v1316
    %v1322 = vmul.f32 1.0, %v1321
    %v1323 = vtanh.pop %v1283
    %v1324 = vxor.u32 %v1284, 2147483648
    %v1325 = vmul.f32 %v1324, 1.442695
    %v1326 = vpow.pop %v1325
    %v1327 = vadd.f32 %v1326, 1.0
    %v1328 = vrcp.pop %v1327
    %v1329 = vmul.f32 %v1327, %v1328
    %v1330 = vsub.f32 1.0, %v1329
    %v1331 = vmul.f32 %v1328, %v1330
    %v1332 = vadd.f32 %v1328, %v1331
    %vm1333 = vweird.f32 %v1327
    %vm1334 = vweird.f32 %v1328
    %vm1335 = vmor %vm1333, %vm1334
    %v1336 = vsel %vm1335, %v1328, %v1332
    %v1337 = vand.u32 2147483647, %v1327
    %vm1338 = vcmp.eq.f32.partialorder %v1337, 8.507059e+37
    %v1339 = vand.u32 %v1327, 2147483648
    %v1340 = vor.u32 1.1754944e-38, %v1339
    %v1341 = vsel %vm1338, %v1340, %v1336
    %v1342 = vmul.f32 1.0, %v1341
    %v1343 = vmul.f32 %v1322, %v1127
    %v1344 = vmul.f32 %v1303, %v1323
    %v1345 = vadd.f32 %v1343, %v1344
    %v1346 = vtanh.pop %v1345
    %v1347 = vmul.f32 %v1342, %v1346
    %s1348 = scalar_lea.vmem [#allocation7], 40
    %1349 = vst [vmem:[%s1348] sm:$0xff] %v1347
    // Predicated region
    $region18: #{tpu_custom_call.1} parent=1 // pred_check
      _
    $region19: #{tpu_custom_call.1} parent=1 // pred_check_branch
      %1351 = sbr.rel (0) target = $region21
    $region20: #{tpu_custom_call.1} parent=1 // pred_region
      %1353 = vsyncadd [#allocation4], 0
      %s1354 = sshll.u32 [#allocation7], 4
      %s1355 = int_to_ptr.vmem [resolvable:$true] %s1354
      %s1356 = sshll.u32 %s2, 4
      %s1357 = int_to_ptr.hbm [resolvable:$true] %s1356
      %1362 = dma.vmem_to_hbm [thread:$0]  %s1355, 768, %s1357, [#allocation4], 128, 128, 8
    $region21: #{tpu_custom_call.1} parent=1 // pred_fallthru
      _
    // Predicated region
    $region22: #{tpu_custom_call.1} parent=1 // pred_check
      _
    $region23: #{tpu_custom_call.1} parent=1 // pred_check_branch
      %1364 = sbr.rel (0) target = $region25
    $region24: #{tpu_custom_call.1} parent=1 // pred_region
      %1366 = dma.done [#allocation4], 768
    $region25: #{tpu_custom_call.1} parent=1 // pred_fallthru
      _
    %1367 = vsyncpa [#allocation3], 1
    %1368 = vsyncpa [#allocation6], 1
    %1369 = vsyncpa [#allocation4], 1

</llo_original>
